<compile_context>
chip_gen: v7x
topology: tpu7x:2x2x1
jax: 0.10.0
libtpu: 0.0.40
codegen_flags: <defaults>
</compile_context>

<pallas_src>
import functools

import numpy as np
import jax
import jax.numpy as jnp
from jax import lax
from jax.experimental import pallas as pl
from jax.experimental.pallas import tpu as pltpu


# ------------------------------ fused kernel ---------------------------------
def _cross_layer_kernel(m_ref, x_ref, wq_ref, wkv_ref, bkv_ref, wo_ref, bo_ref,
                        out_ref, o_buf, *, heads, dim_heads, eps):
    inner = heads * dim_heads
    scale = float(dim_heads) ** -0.5

    Mf = m_ref[...]                                    # (nM, Md) f32 (residual)
    # fold 1/sqrt(Dh) into q once: q_h = (scale*M) @ Wq[:, h]; bf16 MXU operands
    m_bf = (Mf * scale).astype(jnp.bfloat16)
    x_bf = x_ref[...].astype(jnp.bfloat16)             # (nX, Xd)

    for h in range(heads):                             # static unroll, H small
        ksl = slice(h * dim_heads, (h + 1) * dim_heads)
        vsl = slice(inner + h * dim_heads, inner + (h + 1) * dim_heads)
        # per-head projections via static weight-ref column slices (free);
        # contraction stays full-width, no lane-slicing of computed activations
        qh = jnp.dot(m_bf, wq_ref[:, ksl],
                     preferred_element_type=jnp.float32)               # (nM, Dh)
        kh = (jnp.dot(x_bf, wkv_ref[:, ksl],
                      preferred_element_type=jnp.float32)
              + bkv_ref[:, ksl])                                       # (nX, Dh)
        vh = (jnp.dot(x_bf, wkv_ref[:, vsl],
                      preferred_element_type=jnp.float32)
              + bkv_ref[:, vsl])                                       # (nX, Dh)

        # sim_h = q_h k_h^T  (scale already folded into q)
        sim = lax.dot_general(qh.astype(jnp.bfloat16), kh.astype(jnp.bfloat16),
                              (((1,), (1,)), ((), ())),
                              preferred_element_type=jnp.float32)      # (nM, nX)
        sim = sim - jnp.max(sim, axis=-1, keepdims=True)
        p = jnp.exp(sim)
        attn = p * pl.reciprocal(jnp.sum(p, axis=-1, keepdims=True), approx=True)
        oh = jnp.dot(attn.astype(jnp.bfloat16), vh.astype(jnp.bfloat16),
                     preferred_element_type=jnp.float32)               # (nM, Dh)
        # head concat via lane-dense scratch at a static 32-lane offset
        o_buf[:, ksl] = oh.astype(o_buf.dtype)

    # single full-width output projection over the concat buffer
    out = (jnp.dot(o_buf[...], wo_ref[...], preferred_element_type=jnp.float32)
           + bo_ref[...])
    out = out + Mf                                     # residual (dropout=identity, eval)
    # F.layer_norm(out, [M_dim]) — no learnable affine; var = E[x^2] - mean^2
    mean = jnp.mean(out, axis=-1, keepdims=True)
    msq = jnp.mean(out * out, axis=-1, keepdims=True)
    var = msq - mean * mean
    out_ref[...] = ((out - mean) * lax.rsqrt(var + eps)).astype(out_ref.dtype)


def cross_layer_forward(M, x, w_q, w_kv, b_kv, w_o, b_o, *,
                        heads, dim_heads, eps=1e-5):
    n_m, m_dim = M.shape
    inner = heads * dim_heads
    assert inner == m_dim, "residual requires heads * dim_heads == M_dim"
    kernel = functools.partial(_cross_layer_kernel, heads=heads,
                               dim_heads=dim_heads, eps=eps)

    def vmem():
        return pl.BlockSpec(memory_space=pltpu.MemorySpace.VMEM)

    return pl.pallas_call(
        kernel,
        out_shape=jax.ShapeDtypeStruct((n_m, m_dim), jnp.float32),
        in_specs=[vmem() for _ in range(7)],
        out_specs=vmem(),
        scratch_shapes=[pltpu.VMEM((n_m, inner), jnp.bfloat16)],
    )(M, x,
      w_q.astype(jnp.bfloat16),            # MXU operands in bf16 (halves DMA)
      w_kv.astype(jnp.bfloat16),
      b_kv[None, :],                       # biases stay f32
      w_o.astype(jnp.bfloat16),
      b_o[None, :])


# --------------------------- pure-JAX reference -------------------------------
def ref_cross_layer(M, x, w_q, w_kv, b_kv, w_o, b_o, *, heads, dim_heads,
                    eps=1e-5):
    n_m, _ = M.shape
    inner = heads * dim_heads
    q = M @ w_q
    kv = x @ w_kv + b_kv
    k, v = kv[:, :inner], kv[:, inner:]
    qh = q.reshape(n_m, heads, dim_heads).transpose(1, 0, 2)       # (H, nM, Dh)
    kh = k.reshape(-1, heads, dim_heads).transpose(1, 0, 2)        # (H, nX, Dh)
    vh = v.reshape(-1, heads, dim_heads).transpose(1, 0, 2)        # (H, nX, Dh)
    sim = jnp.einsum("hid,hjd->hij", qh, kh) * dim_heads ** -0.5
    attn = jax.nn.softmax(sim, axis=-1)
    o = jnp.einsum("hij,hjd->hid", attn, vh)                       # (H, nM, Dh)
    o = o.transpose(1, 0, 2).reshape(n_m, inner)
    out = o @ w_o + b_o
    out = out + M
    mean = out.mean(-1, keepdims=True)
    var = ((out - mean) ** 2).mean(-1, keepdims=True)
    return (out - mean) / jnp.sqrt(var + eps)


# ----------------------------------- main --------------------------------------
if __name__ == "__main__":
    M_DIM = 128          # model dim of the latent array M
    HEADS = 4
    DIM_HEADS = 32       # inner_dim = HEADS*DIM_HEADS = 128 == M_DIM (residual requires this)
    N_M = 16             # number of latent tokens
    N_X = 32             # number of input tokens
    X_DIM = 64           # input feature dim (to_kv maps X_DIM -> 2*inner_dim)

    inner = HEADS * DIM_HEADS
    key = jax.random.PRNGKey(0)
    ks = jax.random.split(key, 7)
    M = jax.random.normal(ks[0], (N_M, M_DIM), jnp.float32)
    x = jax.random.normal(ks[1], (N_X, X_DIM), jnp.float32)
    w_q = (jax.random.normal(ks[2], (M_DIM, inner)) / np.sqrt(M_DIM)).astype(jnp.float32)
    w_kv = (jax.random.normal(ks[3], (X_DIM, 2 * inner)) / np.sqrt(X_DIM)).astype(jnp.float32)
    b_kv = (0.01 * jax.random.normal(ks[4], (2 * inner,))).astype(jnp.float32)
    w_o = (jax.random.normal(ks[5], (inner, M_DIM)) / np.sqrt(inner)).astype(jnp.float32)
    b_o = (0.01 * jax.random.normal(ks[6], (M_DIM,))).astype(jnp.float32)

    fwd = jax.jit(functools.partial(cross_layer_forward,
                                    heads=HEADS, dim_heads=DIM_HEADS))
    out = fwd(M, x, w_q, w_kv, b_kv, w_o, b_o)
    jax.block_until_ready(out)

    ref = ref_cross_layer(M, x, w_q, w_kv, b_kv, w_o, b_o,
                          heads=HEADS, dim_heads=DIM_HEADS)
    # tolerance accounts for bf16 MXU operands + approx reciprocal
    np.testing.assert_allclose(np.asarray(out), np.asarray(ref),
                               rtol=1e-2, atol=1e-2)
    print("KERNEL_OK")
</pallas_src>

<mosaic_0001>
module attributes {stable_mosaic.version = 11 : i64} {
  func.func @_cross_layer_kernel(%arg0: memref<16x128xf32, #tpu.memory_space<vmem>>, %arg1: memref<32x64xf32, #tpu.memory_space<vmem>>, %arg2: memref<128x128xbf16, #tpu.memory_space<vmem>>, %arg3: memref<64x256xbf16, #tpu.memory_space<vmem>>, %arg4: memref<1x256xf32, #tpu.memory_space<vmem>>, %arg5: memref<128x128xbf16, #tpu.memory_space<vmem>>, %arg6: memref<1x128xf32, #tpu.memory_space<vmem>>, %arg7: memref<16x128xf32, #tpu.memory_space<vmem>>, %arg8: memref<16x128xbf16, #tpu.memory_space<vmem>>) attributes {dimension_semantics = [], scalar_prefetch = 0 : i64, scratch_operands = 1 : i64, tpu.core_type = #tpu.core_type<tc>} {
    %c0 = arith.constant 0 : index
    %c0_0 = arith.constant 0 : index
    %0 = vector.load %arg0[%c0, %c0_0] : memref<16x128xf32, #tpu.memory_space<vmem>>, vector<16x128xf32>
    %cst = arith.constant 0.176776692 : f32
    %1 = vector.broadcast %cst : f32 to vector<16x128xf32>
    %2 = arith.mulf %0, %1 : vector<16x128xf32>
    %3 = arith.truncf %2 : vector<16x128xf32> to vector<16x128xbf16>
    %c0_1 = arith.constant 0 : index
    %c0_2 = arith.constant 0 : index
    %4 = vector.load %arg1[%c0_1, %c0_2] : memref<32x64xf32, #tpu.memory_space<vmem>>, vector<32x64xf32>
    %5 = arith.truncf %4 : vector<32x64xf32> to vector<32x64xbf16>
    %c0_3 = arith.constant 0 : index
    %c0_4 = arith.constant 0 : index
    %6 = vector.load %arg2[%c0_3, %c0_4] : memref<128x128xbf16, #tpu.memory_space<vmem>>, vector<128x32xbf16>
    %cst_5 = arith.constant dense<0.000000e+00> : vector<16x32xf32>
    %7 = tpu.matmul %3, %6, %cst_5 {dimension_numbers = #tpu.dot_dimension_numbers<[1], [0], [0], [1], [0, 0, 1, 1], [], []>} : vector<16x128xbf16>, vector<128x32xbf16>, vector<16x32xf32> -> vector<16x32xf32>
    %c0_6 = arith.constant 0 : index
    %c0_7 = arith.constant 0 : index
    %8 = vector.load %arg3[%c0_6, %c0_7] : memref<64x256xbf16, #tpu.memory_space<vmem>>, vector<64x32xbf16>
    %cst_8 = arith.constant dense<0.000000e+00> : vector<32x32xf32>
    %9 = tpu.matmul %5, %8, %cst_8 {dimension_numbers = #tpu.dot_dimension_numbers<[1], [0], [0], [1], [0, 0, 1, 1], [], []>} : vector<32x64xbf16>, vector<64x32xbf16>, vector<32x32xf32> -> vector<32x32xf32>
    %c0_9 = arith.constant 0 : index
    %c0_10 = arith.constant 0 : index
    %10 = vector.load %arg4[%c0_9, %c0_10] : memref<1x256xf32, #tpu.memory_space<vmem>>, vector<1x32xf32>
    %11 = vector.broadcast %10 : vector<1x32xf32> to vector<32x32xf32>
    %12 = arith.addf %9, %11 : vector<32x32xf32>
    %c0_11 = arith.constant 0 : index
    %c128 = arith.constant 128 : index
    %13 = vector.load %arg3[%c0_11, %c128] : memref<64x256xbf16, #tpu.memory_space<vmem>>, vector<64x32xbf16>
    %cst_12 = arith.constant dense<0.000000e+00> : vector<32x32xf32>
    %14 = tpu.matmul %5, %13, %cst_12 {dimension_numbers = #tpu.dot_dimension_numbers<[1], [0], [0], [1], [0, 0, 1, 1], [], []>} : vector<32x64xbf16>, vector<64x32xbf16>, vector<32x32xf32> -> vector<32x32xf32>
    %c0_13 = arith.constant 0 : index
    %c128_14 = arith.constant 128 : index
    %15 = vector.load %arg4[%c0_13, %c128_14] : memref<1x256xf32, #tpu.memory_space<vmem>>, vector<1x32xf32>
    %16 = vector.broadcast %15 : vector<1x32xf32> to vector<32x32xf32>
    %17 = arith.addf %14, %16 : vector<32x32xf32>
    %18 = arith.truncf %7 : vector<16x32xf32> to vector<16x32xbf16>
    %19 = arith.truncf %12 : vector<32x32xf32> to vector<32x32xbf16>
    %cst_15 = arith.constant dense<0.000000e+00> : vector<16x32xf32>
    %20 = tpu.matmul %18, %19, %cst_15 {dimension_numbers = #tpu.dot_dimension_numbers<[1], [1], [0], [0], [0, 0, 1, 0], [], []>} : vector<16x32xbf16>, vector<32x32xbf16>, vector<16x32xf32> -> vector<16x32xf32>
    %cst_16 = arith.constant dense<0xFF800000> : vector<16xf32>
    %21 = vector.multi_reduction <maximumf>, %20, %cst_16 [1] : vector<16x32xf32> to vector<16xf32>
    %22 = vector.shape_cast %21 : vector<16xf32> to vector<16x1xf32>
    %23 = vector.broadcast %22 : vector<16x1xf32> to vector<16x32xf32>
    %24 = arith.subf %20, %23 : vector<16x32xf32>
    %25 = math.exp %24 : vector<16x32xf32>
    %cst_17 = arith.constant dense<0.000000e+00> : vector<16xf32>
    %26 = vector.multi_reduction <add>, %25, %cst_17 [1] : vector<16x32xf32> to vector<16xf32>
    %27 = vector.shape_cast %26 : vector<16xf32> to vector<16x1xf32>
    %28 = tpu.reciprocal %27 {approx = true} : vector<16x1xf32> -> vector<16x1xf32>
    %29 = vector.broadcast %28 : vector<16x1xf32> to vector<16x32xf32>
    %30 = arith.mulf %25, %29 : vector<16x32xf32>
    %31 = arith.truncf %30 : vector<16x32xf32> to vector<16x32xbf16>
    %32 = arith.truncf %17 : vector<32x32xf32> to vector<32x32xbf16>
    %cst_18 = arith.constant dense<0.000000e+00> : vector<16x32xf32>
    %33 = tpu.matmul %31, %32, %cst_18 {dimension_numbers = #tpu.dot_dimension_numbers<[1], [0], [0], [1], [0, 0, 1, 1], [], []>} : vector<16x32xbf16>, vector<32x32xbf16>, vector<16x32xf32> -> vector<16x32xf32>
    %34 = arith.truncf %33 : vector<16x32xf32> to vector<16x32xbf16>
    %c0_19 = arith.constant 0 : index
    %c0_20 = arith.constant 0 : index
    %35 = vector.load %arg8[%c0_19, %c0_20] : memref<16x128xbf16, #tpu.memory_space<vmem>>, vector<16x32xbf16>
    tpu.vector_store %arg8[%c0_19, %c0_20], %34 {strides = array<i32>} : memref<16x128xbf16, #tpu.memory_space<vmem>>, vector<16x32xbf16>,
    %c0_21 = arith.constant 0 : index
    %c32 = arith.constant 32 : index
    %36 = vector.load %arg2[%c0_21, %c32] : memref<128x128xbf16, #tpu.memory_space<vmem>>, vector<128x32xbf16>
    %cst_22 = arith.constant dense<0.000000e+00> : vector<16x32xf32>
    %37 = tpu.matmul %3, %36, %cst_22 {dimension_numbers = #tpu.dot_dimension_numbers<[1], [0], [0], [1], [0, 0, 1, 1], [], []>} : vector<16x128xbf16>, vector<128x32xbf16>, vector<16x32xf32> -> vector<16x32xf32>
    %c0_23 = arith.constant 0 : index
    %c32_24 = arith.constant 32 : index
    %38 = vector.load %arg3[%c0_23, %c32_24] : memref<64x256xbf16, #tpu.memory_space<vmem>>, vector<64x32xbf16>
    %cst_25 = arith.constant dense<0.000000e+00> : vector<32x32xf32>
    %39 = tpu.matmul %5, %38, %cst_25 {dimension_numbers = #tpu.dot_dimension_numbers<[1], [0], [0], [1], [0, 0, 1, 1], [], []>} : vector<32x64xbf16>, vector<64x32xbf16>, vector<32x32xf32> -> vector<32x32xf32>
    %c0_26 = arith.constant 0 : index
    %c32_27 = arith.constant 32 : index
    %40 = vector.load %arg4[%c0_26, %c32_27] : memref<1x256xf32, #tpu.memory_space<vmem>>, vector<1x32xf32>
    %41 = vector.broadcast %40 : vector<1x32xf32> to vector<32x32xf32>
    %42 = arith.addf %39, %41 : vector<32x32xf32>
    %c0_28 = arith.constant 0 : index
    %c160 = arith.constant 160 : index
    %43 = vector.load %arg3[%c0_28, %c160] : memref<64x256xbf16, #tpu.memory_space<vmem>>, vector<64x32xbf16>
    %cst_29 = arith.constant dense<0.000000e+00> : vector<32x32xf32>
    %44 = tpu.matmul %5, %43, %cst_29 {dimension_numbers = #tpu.dot_dimension_numbers<[1], [0], [0], [1], [0, 0, 1, 1], [], []>} : vector<32x64xbf16>, vector<64x32xbf16>, vector<32x32xf32> -> vector<32x32xf32>
    %c0_30 = arith.constant 0 : index
    %c160_31 = arith.constant 160 : index
    %45 = vector.load %arg4[%c0_30, %c160_31] : memref<1x256xf32, #tpu.memory_space<vmem>>, vector<1x32xf32>
    %46 = vector.broadcast %45 : vector<1x32xf32> to vector<32x32xf32>
    %47 = arith.addf %44, %46 : vector<32x32xf32>
    %48 = arith.truncf %37 : vector<16x32xf32> to vector<16x32xbf16>
    %49 = arith.truncf %42 : vector<32x32xf32> to vector<32x32xbf16>
    %cst_32 = arith.constant dense<0.000000e+00> : vector<16x32xf32>
    %50 = tpu.matmul %48, %49, %cst_32 {dimension_numbers = #tpu.dot_dimension_numbers<[1], [1], [0], [0], [0, 0, 1, 0], [], []>} : vector<16x32xbf16>, vector<32x32xbf16>, vector<16x32xf32> -> vector<16x32xf32>
    %cst_33 = arith.constant dense<0xFF800000> : vector<16xf32>
    %51 = vector.multi_reduction <maximumf>, %50, %cst_33 [1] : vector<16x32xf32> to vector<16xf32>
    %52 = vector.shape_cast %51 : vector<16xf32> to vector<16x1xf32>
    %53 = vector.broadcast %52 : vector<16x1xf32> to vector<16x32xf32>
    %54 = arith.subf %50, %53 : vector<16x32xf32>
    %55 = math.exp %54 : vector<16x32xf32>
    %cst_34 = arith.constant dense<0.000000e+00> : vector<16xf32>
    %56 = vector.multi_reduction <add>, %55, %cst_34 [1] : vector<16x32xf32> to vector<16xf32>
    %57 = vector.shape_cast %56 : vector<16xf32> to vector<16x1xf32>
    %58 = tpu.reciprocal %57 {approx = true} : vector<16x1xf32> -> vector<16x1xf32>
    %59 = vector.broadcast %58 : vector<16x1xf32> to vector<16x32xf32>
    %60 = arith.mulf %55, %59 : vector<16x32xf32>
    %61 = arith.truncf %60 : vector<16x32xf32> to vector<16x32xbf16>
    %62 = arith.truncf %47 : vector<32x32xf32> to vector<32x32xbf16>
    %cst_35 = arith.constant dense<0.000000e+00> : vector<16x32xf32>
    %63 = tpu.matmul %61, %62, %cst_35 {dimension_numbers = #tpu.dot_dimension_numbers<[1], [0], [0], [1], [0, 0, 1, 1], [], []>} : vector<16x32xbf16>, vector<32x32xbf16>, vector<16x32xf32> -> vector<16x32xf32>
    %64 = arith.truncf %63 : vector<16x32xf32> to vector<16x32xbf16>
    %c0_36 = arith.constant 0 : index
    %c32_37 = arith.constant 32 : index
    %65 = vector.load %arg8[%c0_36, %c32_37] : memref<16x128xbf16, #tpu.memory_space<vmem>>, vector<16x32xbf16>
    tpu.vector_store %arg8[%c0_36, %c32_37], %64 {strides = array<i32>} : memref<16x128xbf16, #tpu.memory_space<vmem>>, vector<16x32xbf16>,
    %c0_38 = arith.constant 0 : index
    %c64 = arith.constant 64 : index
    %66 = vector.load %arg2[%c0_38, %c64] : memref<128x128xbf16, #tpu.memory_space<vmem>>, vector<128x32xbf16>
    %cst_39 = arith.constant dense<0.000000e+00> : vector<16x32xf32>
    %67 = tpu.matmul %3, %66, %cst_39 {dimension_numbers = #tpu.dot_dimension_numbers<[1], [0], [0], [1], [0, 0, 1, 1], [], []>} : vector<16x128xbf16>, vector<128x32xbf16>, vector<16x32xf32> -> vector<16x32xf32>
    %c0_40 = arith.constant 0 : index
    %c64_41 = arith.constant 64 : index
    %68 = vector.load %arg3[%c0_40, %c64_41] : memref<64x256xbf16, #tpu.memory_space<vmem>>, vector<64x32xbf16>
    %cst_42 = arith.constant dense<0.000000e+00> : vector<32x32xf32>
    %69 = tpu.matmul %5, %68, %cst_42 {dimension_numbers = #tpu.dot_dimension_numbers<[1], [0], [0], [1], [0, 0, 1, 1], [], []>} : vector<32x64xbf16>, vector<64x32xbf16>, vector<32x32xf32> -> vector<32x32xf32>
    %c0_43 = arith.constant 0 : index
    %c64_44 = arith.constant 64 : index
    %70 = vector.load %arg4[%c0_43, %c64_44] : memref<1x256xf32, #tpu.memory_space<vmem>>, vector<1x32xf32>
    %71 = vector.broadcast %70 : vector<1x32xf32> to vector<32x32xf32>
    %72 = arith.addf %69, %71 : vector<32x32xf32>
    %c0_45 = arith.constant 0 : index
    %c192 = arith.constant 192 : index
    %73 = vector.load %arg3[%c0_45, %c192] : memref<64x256xbf16, #tpu.memory_space<vmem>>, vector<64x32xbf16>
    %cst_46 = arith.constant dense<0.000000e+00> : vector<32x32xf32>
    %74 = tpu.matmul %5, %73, %cst_46 {dimension_numbers = #tpu.dot_dimension_numbers<[1], [0], [0], [1], [0, 0, 1, 1], [], []>} : vector<32x64xbf16>, vector<64x32xbf16>, vector<32x32xf32> -> vector<32x32xf32>
    %c0_47 = arith.constant 0 : index
    %c192_48 = arith.constant 192 : index
    %75 = vector.load %arg4[%c0_47, %c192_48] : memref<1x256xf32, #tpu.memory_space<vmem>>, vector<1x32xf32>
    %76 = vector.broadcast %75 : vector<1x32xf32> to vector<32x32xf32>
    %77 = arith.addf %74, %76 : vector<32x32xf32>
    %78 = arith.truncf %67 : vector<16x32xf32> to vector<16x32xbf16>
    %79 = arith.truncf %72 : vector<32x32xf32> to vector<32x32xbf16>
    %cst_49 = arith.constant dense<0.000000e+00> : vector<16x32xf32>
    %80 = tpu.matmul %78, %79, %cst_49 {dimension_numbers = #tpu.dot_dimension_numbers<[1], [1], [0], [0], [0, 0, 1, 0], [], []>} : vector<16x32xbf16>, vector<32x32xbf16>, vector<16x32xf32> -> vector<16x32xf32>
    %cst_50 = arith.constant dense<0xFF800000> : vector<16xf32>
    %81 = vector.multi_reduction <maximumf>, %80, %cst_50 [1] : vector<16x32xf32> to vector<16xf32>
    %82 = vector.shape_cast %81 : vector<16xf32> to vector<16x1xf32>
    %83 = vector.broadcast %82 : vector<16x1xf32> to vector<16x32xf32>
    %84 = arith.subf %80, %83 : vector<16x32xf32>
    %85 = math.exp %84 : vector<16x32xf32>
    %cst_51 = arith.constant dense<0.000000e+00> : vector<16xf32>
    %86 = vector.multi_reduction <add>, %85, %cst_51 [1] : vector<16x32xf32> to vector<16xf32>
    %87 = vector.shape_cast %86 : vector<16xf32> to vector<16x1xf32>
    %88 = tpu.reciprocal %87 {approx = true} : vector<16x1xf32> -> vector<16x1xf32>
    %89 = vector.broadcast %88 : vector<16x1xf32> to vector<16x32xf32>
    %90 = arith.mulf %85, %89 : vector<16x32xf32>
    %91 = arith.truncf %90 : vector<16x32xf32> to vector<16x32xbf16>
    %92 = arith.truncf %77 : vector<32x32xf32> to vector<32x32xbf16>
    %cst_52 = arith.constant dense<0.000000e+00> : vector<16x32xf32>
    %93 = tpu.matmul %91, %92, %cst_52 {dimension_numbers = #tpu.dot_dimension_numbers<[1], [0], [0], [1], [0, 0, 1, 1], [], []>} : vector<16x32xbf16>, vector<32x32xbf16>, vector<16x32xf32> -> vector<16x32xf32>
    %94 = arith.truncf %93 : vector<16x32xf32> to vector<16x32xbf16>
    %c0_53 = arith.constant 0 : index
    %c64_54 = arith.constant 64 : index
    %95 = vector.load %arg8[%c0_53, %c64_54] : memref<16x128xbf16, #tpu.memory_space<vmem>>, vector<16x32xbf16>
    tpu.vector_store %arg8[%c0_53, %c64_54], %94 {strides = array<i32>} : memref<16x128xbf16, #tpu.memory_space<vmem>>, vector<16x32xbf16>,
    %c0_55 = arith.constant 0 : index
    %c96 = arith.constant 96 : index
    %96 = vector.load %arg2[%c0_55, %c96] : memref<128x128xbf16, #tpu.memory_space<vmem>>, vector<128x32xbf16>
    %cst_56 = arith.constant dense<0.000000e+00> : vector<16x32xf32>
    %97 = tpu.matmul %3, %96, %cst_56 {dimension_numbers = #tpu.dot_dimension_numbers<[1], [0], [0], [1], [0, 0, 1, 1], [], []>} : vector<16x128xbf16>, vector<128x32xbf16>, vector<16x32xf32> -> vector<16x32xf32>
    %c0_57 = arith.constant 0 : index
    %c96_58 = arith.constant 96 : index
    %98 = vector.load %arg3[%c0_57, %c96_58] : memref<64x256xbf16, #tpu.memory_space<vmem>>, vector<64x32xbf16>
    %cst_59 = arith.constant dense<0.000000e+00> : vector<32x32xf32>
    %99 = tpu.matmul %5, %98, %cst_59 {dimension_numbers = #tpu.dot_dimension_numbers<[1], [0], [0], [1], [0, 0, 1, 1], [], []>} : vector<32x64xbf16>, vector<64x32xbf16>, vector<32x32xf32> -> vector<32x32xf32>
    %c0_60 = arith.constant 0 : index
    %c96_61 = arith.constant 96 : index
    %100 = vector.load %arg4[%c0_60, %c96_61] : memref<1x256xf32, #tpu.memory_space<vmem>>, vector<1x32xf32>
    %101 = vector.broadcast %100 : vector<1x32xf32> to vector<32x32xf32>
    %102 = arith.addf %99, %101 : vector<32x32xf32>
    %c0_62 = arith.constant 0 : index
    %c224 = arith.constant 224 : index
    %103 = vector.load %arg3[%c0_62, %c224] : memref<64x256xbf16, #tpu.memory_space<vmem>>, vector<64x32xbf16>
    %cst_63 = arith.constant dense<0.000000e+00> : vector<32x32xf32>
    %104 = tpu.matmul %5, %103, %cst_63 {dimension_numbers = #tpu.dot_dimension_numbers<[1], [0], [0], [1], [0, 0, 1, 1], [], []>} : vector<32x64xbf16>, vector<64x32xbf16>, vector<32x32xf32> -> vector<32x32xf32>
    %c0_64 = arith.constant 0 : index
    %c224_65 = arith.constant 224 : index
    %105 = vector.load %arg4[%c0_64, %c224_65] : memref<1x256xf32, #tpu.memory_space<vmem>>, vector<1x32xf32>
    %106 = vector.broadcast %105 : vector<1x32xf32> to vector<32x32xf32>
    %107 = arith.addf %104, %106 : vector<32x32xf32>
    %108 = arith.truncf %97 : vector<16x32xf32> to vector<16x32xbf16>
    %109 = arith.truncf %102 : vector<32x32xf32> to vector<32x32xbf16>
    %cst_66 = arith.constant dense<0.000000e+00> : vector<16x32xf32>
    %110 = tpu.matmul %108, %109, %cst_66 {dimension_numbers = #tpu.dot_dimension_numbers<[1], [1], [0], [0], [0, 0, 1, 0], [], []>} : vector<16x32xbf16>, vector<32x32xbf16>, vector<16x32xf32> -> vector<16x32xf32>
    %cst_67 = arith.constant dense<0xFF800000> : vector<16xf32>
    %111 = vector.multi_reduction <maximumf>, %110, %cst_67 [1] : vector<16x32xf32> to vector<16xf32>
    %112 = vector.shape_cast %111 : vector<16xf32> to vector<16x1xf32>
    %113 = vector.broadcast %112 : vector<16x1xf32> to vector<16x32xf32>
    %114 = arith.subf %110, %113 : vector<16x32xf32>
    %115 = math.exp %114 : vector<16x32xf32>
    %cst_68 = arith.constant dense<0.000000e+00> : vector<16xf32>
    %116 = vector.multi_reduction <add>, %115, %cst_68 [1] : vector<16x32xf32> to vector<16xf32>
    %117 = vector.shape_cast %116 : vector<16xf32> to vector<16x1xf32>
    %118 = tpu.reciprocal %117 {approx = true} : vector<16x1xf32> -> vector<16x1xf32>
    %119 = vector.broadcast %118 : vector<16x1xf32> to vector<16x32xf32>
    %120 = arith.mulf %115, %119 : vector<16x32xf32>
    %121 = arith.truncf %120 : vector<16x32xf32> to vector<16x32xbf16>
    %122 = arith.truncf %107 : vector<32x32xf32> to vector<32x32xbf16>
    %cst_69 = arith.constant dense<0.000000e+00> : vector<16x32xf32>
    %123 = tpu.matmul %121, %122, %cst_69 {dimension_numbers = #tpu.dot_dimension_numbers<[1], [0], [0], [1], [0, 0, 1, 1], [], []>} : vector<16x32xbf16>, vector<32x32xbf16>, vector<16x32xf32> -> vector<16x32xf32>
    %124 = arith.truncf %123 : vector<16x32xf32> to vector<16x32xbf16>
    %c0_70 = arith.constant 0 : index
    %c96_71 = arith.constant 96 : index
    %125 = vector.load %arg8[%c0_70, %c96_71] : memref<16x128xbf16, #tpu.memory_space<vmem>>, vector<16x32xbf16>
    tpu.vector_store %arg8[%c0_70, %c96_71], %124 {strides = array<i32>} : memref<16x128xbf16, #tpu.memory_space<vmem>>, vector<16x32xbf16>,
    %c0_72 = arith.constant 0 : index
    %c0_73 = arith.constant 0 : index
    %126 = vector.load %arg8[%c0_72, %c0_73] : memref<16x128xbf16, #tpu.memory_space<vmem>>, vector<16x128xbf16>
    %c0_74 = arith.constant 0 : index
    %c0_75 = arith.constant 0 : index
    %127 = vector.load %arg5[%c0_74, %c0_75] : memref<128x128xbf16, #tpu.memory_space<vmem>>, vector<128x128xbf16>
    %cst_76 = arith.constant dense<0.000000e+00> : vector<16x128xf32>
    %128 = tpu.matmul %126, %127, %cst_76 {dimension_numbers = #tpu.dot_dimension_numbers<[1], [0], [0], [1], [0, 0, 1, 1], [], []>} : vector<16x128xbf16>, vector<128x128xbf16>, vector<16x128xf32> -> vector<16x128xf32>
    %c0_77 = arith.constant 0 : index
    %c0_78 = arith.constant 0 : index
    %129 = vector.load %arg6[%c0_77, %c0_78] : memref<1x128xf32, #tpu.memory_space<vmem>>, vector<1x128xf32>
    %130 = vector.broadcast %129 : vector<1x128xf32> to vector<16x128xf32>
    %131 = arith.addf %128, %130 : vector<16x128xf32>
    %132 = arith.addf %131, %0 : vector<16x128xf32>
    %cst_79 = arith.constant dense<0.000000e+00> : vector<16xf32>
    %133 = vector.multi_reduction <add>, %132, %cst_79 [1] : vector<16x128xf32> to vector<16xf32>
    %134 = vector.shape_cast %133 : vector<16xf32> to vector<16x1xf32>
    %cst_80 = arith.constant 1.280000e+02 : f32
    %135 = vector.broadcast %cst_80 : f32 to vector<16x1xf32>
    %136 = arith.divf %134, %135 : vector<16x1xf32>
    %137 = arith.mulf %132, %132 : vector<16x128xf32>
    %cst_81 = arith.constant dense<0.000000e+00> : vector<16xf32>
    %138 = vector.multi_reduction <add>, %137, %cst_81 [1] : vector<16x128xf32> to vector<16xf32>
    %139 = vector.shape_cast %138 : vector<16xf32> to vector<16x1xf32>
    %cst_82 = arith.constant 1.280000e+02 : f32
    %140 = vector.broadcast %cst_82 : f32 to vector<16x1xf32>
    %141 = arith.divf %139, %140 : vector<16x1xf32>
    %142 = arith.mulf %136, %136 : vector<16x1xf32>
    %143 = arith.subf %141, %142 : vector<16x1xf32>
    %144 = vector.broadcast %136 : vector<16x1xf32> to vector<16x128xf32>
    %145 = arith.subf %132, %144 : vector<16x128xf32>
    %cst_83 = arith.constant 9.99999974E-6 : f32
    %146 = vector.broadcast %cst_83 : f32 to vector<16x1xf32>
    %147 = arith.addf %143, %146 : vector<16x1xf32>
    %148 = math.rsqrt %147 : vector<16x1xf32>
    %149 = vector.broadcast %148 : vector<16x1xf32> to vector<16x128xf32>
    %150 = arith.mulf %145, %149 : vector<16x128xf32>
    %c0_84 = arith.constant 0 : index
    %c0_85 = arith.constant 0 : index
    %151 = vector.load %arg7[%c0_84, %c0_85] : memref<16x128xf32, #tpu.memory_space<vmem>>, vector<16x128xf32>
    tpu.vector_store %arg7[%c0_84, %c0_85], %150 {strides = array<i32>} : memref<16x128xf32, #tpu.memory_space<vmem>>, vector<16x128xf32>,
    return
  }
}

</mosaic_0001>

<llo_original>
// kernel: cross_layer_forward.1
$region0: #{cross_layer_forward.1}
  #allocation0 [shape = 'u32[]', space=smem, size = 0x4, offset = 0x4, fixed_abs, tag = 'smem constant byte address 0x4 - core index']
  #allocation1 [shape = 'u32[144,128]{1,0:T(1,128)}', space=vmem, size = 0x12000, scoped, tag = 'internal scratch']
  #allocation2 [shape = 'bf16[16,128]{1,0:T(16,128)(2,1)}', space=vmem, size = 0x1000, scoped, tag = 'scratch operand']
  %s0 = inlined_call_operand.vmem [shape: f32[16,128], index: 0, kind: input, shape index: {}]
  %s1 = inlined_call_operand.vmem [shape: f32[32,64], index: 1, kind: input, shape index: {}]
  %s2 = inlined_call_operand.vmem [shape: bf16[128,128], index: 2, kind: input, shape index: {}]
  %s3 = inlined_call_operand.vmem [shape: bf16[64,256], index: 3, kind: input, shape index: {}]
  %s4 = inlined_call_operand.vmem [shape: f32[1,256], index: 4, kind: input, shape index: {}]
  %s5 = inlined_call_operand.vmem [shape: bf16[128,128], index: 5, kind: input, shape index: {}]
  %s6 = inlined_call_operand.vmem [shape: f32[1,128], index: 6, kind: input, shape index: {}]
  %s7 = inlined_call_operand.hbm [shape: f32[16,128], index: 7, kind: output, shape index: {}]
  %s8 = sld [smem:[#allocation0]]
  $region38: #{cross_layer_forward.1} parent=0
    _
  %s10 = ssub.s32 1, %s8
  %s11 = scalar_select 0, %s10, %s8
  $region1: #{cross_layer_forward.1} parent=0
    #allocation3 [shape = 'u8[8192]{0}', space=vmem, size = 0x2000, scoped, tag = 'output window, operand 0, single buffered']
    #allocation4 [shape = 's32[1]{0}', space=sflag, size = 0x4, scoped, tag = 'scoped memory for cross_layer_forward.1']
    %12 = vsyncpa [#allocation4], 0
    // Predicated region
    $region2: #{cross_layer_forward.1} parent=1 // pred_check
      _
    $region3: #{cross_layer_forward.1} parent=1 // pred_check_branch
      %14 = sbr.rel (0) target = $region5
    $region4: #{cross_layer_forward.1} parent=1 // pred_region
      _
    $region5: #{cross_layer_forward.1} parent=1 // pred_fallthru
      _
    // Predicated region
    $region6: #{cross_layer_forward.1} parent=1 // pred_check
      _
    $region7: #{cross_layer_forward.1} parent=1 // pred_check_branch
      %16 = sbr.rel (0) target = $region9
    $region8: #{cross_layer_forward.1} parent=1 // pred_region
      _
    $region9: #{cross_layer_forward.1} parent=1 // pred_fallthru
      _
    // Predicated region
    $region10: #{cross_layer_forward.1} parent=1 // pred_check
      _
    $region11: #{cross_layer_forward.1} parent=1 // pred_check_branch
      %18 = sbr.rel (0) target = $region13
    $region12: #{cross_layer_forward.1} parent=1 // pred_region
      _
    $region13: #{cross_layer_forward.1} parent=1 // pred_fallthru
      _
    // Predicated region
    $region14: #{cross_layer_forward.1} parent=1 // pred_check
      _
    $region15: #{cross_layer_forward.1} parent=1 // pred_check_branch
      %20 = sbr.rel (0) target = $region17
    $region16: #{cross_layer_forward.1} parent=1 // pred_region
      _
    $region17: #{cross_layer_forward.1} parent=1 // pred_fallthru
      _
    // Predicated region
    $region18: #{cross_layer_forward.1} parent=1 // pred_check
      _
    $region19: #{cross_layer_forward.1} parent=1 // pred_check_branch
      %22 = sbr.rel (0) target = $region21
    $region20: #{cross_layer_forward.1} parent=1 // pred_region
      _
    $region21: #{cross_layer_forward.1} parent=1 // pred_fallthru
      _
    // Predicated region
    $region22: #{cross_layer_forward.1} parent=1 // pred_check
      _
    $region23: #{cross_layer_forward.1} parent=1 // pred_check_branch
      %24 = sbr.rel (0) target = $region25
    $region24: #{cross_layer_forward.1} parent=1 // pred_region
      _
    $region25: #{cross_layer_forward.1} parent=1 // pred_fallthru
      _
    // Predicated region
    $region26: #{cross_layer_forward.1} parent=1 // pred_check
      _
    $region27: #{cross_layer_forward.1} parent=1 // pred_check_branch
      %26 = sbr.rel (0) target = $region29
    $region28: #{cross_layer_forward.1} parent=1 // pred_region
      _
    $region29: #{cross_layer_forward.1} parent=1 // pred_fallthru
      _
    %v28 = vld [vmem:[%s0] sm:$0xff]
    %v29 = vld [vmem:[%s0 + $0x8] sm:$0xff]
    %v30 = vmul.f32 %v28, 0.17677669
    %v31 = vmul.f32 %v29, 0.17677669
    %v32 = vpack.c.bf16 %v31, %v30
    %v33 = vld [vmem:[%s1] sm:$0xff]
    %v34 = vld [vmem:[%s1 + $0x8] sm:$0xff]
    %v35 = vld [vmem:[%s1 + $0x10] sm:$0xff]
    %v36 = vld [vmem:[%s1 + $0x18] sm:$0xff]
    %v37 = vpack.c.bf16 %v34, %v33
    %v38 = vpack.c.bf16 %v36, %v35
    %v39 = vld [vmem:[%s2] sm:$0xf]
    %v40 = vld [vmem:[%s2 + $0x4] sm:$0xf]
    %v41 = vld [vmem:[%s2 + $0x8] sm:$0xf]
    %v42 = vld [vmem:[%s2 + $0xc] sm:$0xf]
    %v43 = vld [vmem:[%s2 + $0x10] sm:$0xf]
    %v44 = vld [vmem:[%s2 + $0x14] sm:$0xf]
    %v45 = vld [vmem:[%s2 + $0x18] sm:$0xf]
    %v46 = vld [vmem:[%s2 + $0x1c] sm:$0xf]
    %v47 = vld [vmem:[%s2 + $0x20] sm:$0xf]
    %v48 = vld [vmem:[%s2 + $0x24] sm:$0xf]
    %v49 = vld [vmem:[%s2 + $0x28] sm:$0xf]
    %v50 = vld [vmem:[%s2 + $0x2c] sm:$0xf]
    %v51 = vld [vmem:[%s2 + $0x30] sm:$0xf]
    %v52 = vld [vmem:[%s2 + $0x34] sm:$0xf]
    %v53 = vld [vmem:[%s2 + $0x38] sm:$0xf]
    %v54 = vld [vmem:[%s2 + $0x3c] sm:$0xf]
    %v71 = vunpack.c.l.b16 %v39
    %v72 = vunpack.c.l.b16 %v40
    %v73 = vunpack.c.l.b16 %v41
    %v74 = vunpack.c.l.b16 %v42
    %v75 = vunpack.c.l.b16 %v43
    %v76 = vunpack.c.l.b16 %v44
    %v77 = vunpack.c.l.b16 %v45
    %v78 = vunpack.c.l.b16 %v46
    %v79 = vunpack.c.l.b16 %v47
    %v80 = vunpack.c.l.b16 %v48
    %v81 = vunpack.c.l.b16 %v49
    %v82 = vunpack.c.l.b16 %v50
    %v83 = vunpack.c.l.b16 %v51
    %v84 = vunpack.c.l.b16 %v52
    %v85 = vunpack.c.l.b16 %v53
    %v86 = vunpack.c.l.b16 %v54
    %v87 = vpack.c.b16 %v72, %v71
    %v88 = vpack.c.b16 %v74, %v73
    %v89 = vpack.c.b16 %v76, %v75
    %v90 = vpack.c.b16 %v78, %v77
    %v91 = vpack.c.b16 %v80, %v79
    %v92 = vpack.c.b16 %v82, %v81
    %v93 = vpack.c.b16 %v84, %v83
    %v94 = vpack.c.b16 %v86, %v85
    %103 = vmatprep.subr.bf16.mxu0 0
    %104 = vmatpush1.bf16.msra.mxu0 %v87
    %105 = vmatprep.subr.bf16.mxu0 0
    %106 = vmatpush1.bf16.msra.mxu0 %v88
    %107 = vmatprep.subr.bf16.mxu0 0
    %108 = vmatpush1.bf16.msra.mxu0 %v89
    %109 = vmatprep.subr.bf16.mxu0 0
    %110 = vmatpush1.bf16.msra.mxu0 %v90
    %111 = vmatprep.subr.bf16.mxu0 0
    %112 = vmatpush1.bf16.msra.mxu0 %v91
    %113 = vmatprep.subr.bf16.mxu0 0
    %114 = vmatpush1.bf16.msra.mxu0 %v92
    %115 = vmatprep.subr.bf16.mxu0 0
    %116 = vmatpush1.bf16.msra.mxu0 %v93
    %117 = vmatprep.subr.bf16.mxu0 0
    %118 = vmatpush1.bf16.msra.mxu0 %v94
    %119 = vmatprep.subr.bf16.mxu0 0
    %120 = vmatpush1.bf16.msra.mxu0 0
    %121 = vmatprep.subr.bf16.mxu0 0
    %122 = vmatpush1.bf16.msra.mxu0 0
    %123 = vmatprep.subr.bf16.mxu0 0
    %124 = vmatpush1.bf16.msra.mxu0 0
    %125 = vmatprep.subr.bf16.mxu0 0
    %126 = vmatpush1.bf16.msra.mxu0 0
    %127 = vmatprep.subr.bf16.mxu0 0
    %128 = vmatpush1.bf16.msra.mxu0 0
    %129 = vmatprep.subr.bf16.mxu0 0
    %130 = vmatpush1.bf16.msra.mxu0 0
    %131 = vmatprep.subr.bf16.mxu0 0
    %132 = vmatpush1.bf16.msra.mxu0 0
    %133 = vmatprep.subr.bf16.mxu0 0
    %134 = vmatpush1.bf16.msra.mxu0 0
    %135 = vmatprep.mubr.bf16.mxu0 0
    %136 = vmatmul.mubr.bf16.gmra.mrb[0].mxu0 %v32
    %v137 = vpop.f32.mrb[0].mxu0
    %v138 = vadd.f32 0.0, %v137
    %v139 = vpop.f32.mrb[0].mxu0
    %v140 = vpop.f32.mrb[0].mxu0
    %v141 = vadd.f32 0.0, %v140
    %v142 = vpop.f32.mrb[0].mxu0
    %143 = vdwg.mxu0
    %v144 = vld [vmem:[%s3] sm:$0xf]
    %v145 = vld [vmem:[%s3 + $0x8] sm:$0xf]
    %v146 = vld [vmem:[%s3 + $0x10] sm:$0xf]
    %v147 = vld [vmem:[%s3 + $0x18] sm:$0xf]
    %v148 = vld [vmem:[%s3 + $0x20] sm:$0xf]
    %v149 = vld [vmem:[%s3 + $0x28] sm:$0xf]
    %v150 = vld [vmem:[%s3 + $0x30] sm:$0xf]
    %v151 = vld [vmem:[%s3 + $0x38] sm:$0xf]
    %v152 = vld [vmem:[%s4] sm:$0x1]
    %v154 = vlaneseq
    %v155 = vshrl.u32 %v154, 7
    %v156 = vsub.s32 0, %v155
    %v157 = vrot.slane %v152, %v156
    %v167 = vunpack.c.l.b16 %v144
    %v168 = vunpack.c.l.b16 %v145
    %v169 = vunpack.c.l.b16 %v146
    %v170 = vunpack.c.l.b16 %v147
    %v171 = vunpack.c.l.b16 %v148
    %v172 = vunpack.c.l.b16 %v149
    %v173 = vunpack.c.l.b16 %v150
    %v174 = vunpack.c.l.b16 %v151
    %v175 = vpack.c.b16 %v168, %v167
    %v176 = vpack.c.b16 %v170, %v169
    %v177 = vpack.c.b16 %v172, %v171
    %v178 = vpack.c.b16 %v174, %v173
    %vm183 = vcmask 523264
    %v185 = vsel %vm183, %v37, 0
    %v188 = vsel %vm183, %v38, 0
    %190 = vmatprep.subr.bf16.mxu0 0
    %191 = vmatpush1.bf16.msra.mxu0 %v175
    %192 = vmatprep.subr.bf16.mxu0 0
    %193 = vmatpush1.bf16.msra.mxu0 %v176
    %194 = vmatprep.subr.bf16.mxu0 0
    %195 = vmatpush1.bf16.msra.mxu0 %v177
    %196 = vmatprep.subr.bf16.mxu0 0
    %197 = vmatpush1.bf16.msra.mxu0 %v178
    %198 = vmatprep.subr.bf16.mxu0 0
    %199 = vmatpush1.bf16.msra.mxu0 0
    %200 = vmatprep.subr.bf16.mxu0 0
    %201 = vmatpush1.bf16.msra.mxu0 0
    %202 = vmatprep.subr.bf16.mxu0 0
    %203 = vmatpush1.bf16.msra.mxu0 0
    %204 = vmatprep.subr.bf16.mxu0 0
    %205 = vmatpush1.bf16.msra.mxu0 0
    %206 = vmatprep.subr.bf16.mxu0 0
    %207 = vmatpush1.bf16.msra.mxu0 0
    %208 = vmatprep.subr.bf16.mxu0 0
    %209 = vmatpush1.bf16.msra.mxu0 0
    %210 = vmatprep.subr.bf16.mxu0 0
    %211 = vmatpush1.bf16.msra.mxu0 0
    %212 = vmatprep.subr.bf16.mxu0 0
    %213 = vmatpush1.bf16.msra.mxu0 0
    %214 = vmatprep.subr.bf16.mxu0 0
    %215 = vmatpush1.bf16.msra.mxu0 0
    %216 = vmatprep.subr.bf16.mxu0 0
    %217 = vmatpush1.bf16.msra.mxu0 0
    %218 = vmatprep.subr.bf16.mxu0 0
    %219 = vmatpush1.bf16.msra.mxu0 0
    %220 = vmatprep.subr.bf16.mxu0 0
    %221 = vmatpush1.bf16.msra.mxu0 0
    %222 = vmatprep.mubr.bf16.mxu0 0
    %223 = vmatmul.mubr.bf16.gmra.mrb[0].mxu0 %v185
    %v224 = vpop.f32.mrb[0].mxu0
    %v225 = vadd.f32 %v157, %v224
    %v226 = vpop.f32.mrb[0].mxu0
    %v227 = vpop.f32.mrb[0].mxu0
    %v228 = vadd.f32 %v157, %v227
    %v229 = vpop.f32.mrb[0].mxu0
    %230 = vmatprep.mubr.bf16.mxu0 0
    %231 = vmatmul.mubr.bf16.gmra.mrb[0].mxu0 %v188
    %v232 = vpop.f32.mrb[0].mxu0
    %v233 = vadd.f32 %v157, %v232
    %v234 = vpop.f32.mrb[0].mxu0
    %v235 = vpop.f32.mrb[0].mxu0
    %v236 = vadd.f32 %v157, %v235
    %v237 = vpop.f32.mrb[0].mxu0
    %238 = vdwg.mxu0
    %v239 = vld [vmem:[%s3 + $0x4] sm:$0xf]
    %v240 = vld [vmem:[%s3 + $0xc] sm:$0xf]
    %v241 = vld [vmem:[%s3 + $0x14] sm:$0xf]
    %v242 = vld [vmem:[%s3 + $0x1c] sm:$0xf]
    %v243 = vld [vmem:[%s3 + $0x24] sm:$0xf]
    %v244 = vld [vmem:[%s3 + $0x2c] sm:$0xf]
    %v245 = vld [vmem:[%s3 + $0x34] sm:$0xf]
    %v246 = vld [vmem:[%s3 + $0x3c] sm:$0xf]
    %v247 = vld [vmem:[%s4 + $0x1] sm:$0x1]
    %v249 = vlaneseq
    %v250 = vshrl.u32 %v249, 7
    %v251 = vsub.s32 0, %v250
    %v252 = vrot.slane %v247, %v251
    %v262 = vunpack.c.l.b16 %v239
    %v263 = vunpack.c.l.b16 %v240
    %v264 = vunpack.c.l.b16 %v241
    %v265 = vunpack.c.l.b16 %v242
    %v266 = vunpack.c.l.b16 %v243
    %v267 = vunpack.c.l.b16 %v244
    %v268 = vunpack.c.l.b16 %v245
    %v269 = vunpack.c.l.b16 %v246
    %v270 = vpack.c.b16 %v263, %v262
    %v271 = vpack.c.b16 %v265, %v264
    %v272 = vpack.c.b16 %v267, %v266
    %v273 = vpack.c.b16 %v269, %v268
    %278 = vmatprep.subr.bf16.mxu0 0
    %279 = vmatpush1.bf16.msra.mxu0 %v270
    %280 = vmatprep.subr.bf16.mxu0 0
    %281 = vmatpush1.bf16.msra.mxu0 %v271
    %282 = vmatprep.subr.bf16.mxu0 0
    %283 = vmatpush1.bf16.msra.mxu0 %v272
    %284 = vmatprep.subr.bf16.mxu0 0
    %285 = vmatpush1.bf16.msra.mxu0 %v273
    %286 = vmatprep.subr.bf16.mxu0 0
    %287 = vmatpush1.bf16.msra.mxu0 0
    %288 = vmatprep.subr.bf16.mxu0 0
    %289 = vmatpush1.bf16.msra.mxu0 0
    %290 = vmatprep.subr.bf16.mxu0 0
    %291 = vmatpush1.bf16.msra.mxu0 0
    %292 = vmatprep.subr.bf16.mxu0 0
    %293 = vmatpush1.bf16.msra.mxu0 0
    %294 = vmatprep.subr.bf16.mxu0 0
    %295 = vmatpush1.bf16.msra.mxu0 0
    %296 = vmatprep.subr.bf16.mxu0 0
    %297 = vmatpush1.bf16.msra.mxu0 0
    %298 = vmatprep.subr.bf16.mxu0 0
    %299 = vmatpush1.bf16.msra.mxu0 0
    %300 = vmatprep.subr.bf16.mxu0 0
    %301 = vmatpush1.bf16.msra.mxu0 0
    %302 = vmatprep.subr.bf16.mxu0 0
    %303 = vmatpush1.bf16.msra.mxu0 0
    %304 = vmatprep.subr.bf16.mxu0 0
    %305 = vmatpush1.bf16.msra.mxu0 0
    %306 = vmatprep.subr.bf16.mxu0 0
    %307 = vmatpush1.bf16.msra.mxu0 0
    %308 = vmatprep.subr.bf16.mxu0 0
    %309 = vmatpush1.bf16.msra.mxu0 0
    %310 = vmatprep.mubr.bf16.mxu0 0
    %311 = vmatmul.mubr.bf16.gmra.mrb[0].mxu0 %v185
    %v312 = vpop.f32.mrb[0].mxu0
    %v313 = vadd.f32 %v252, %v312
    %v314 = vpop.f32.mrb[0].mxu0
    %v315 = vpop.f32.mrb[0].mxu0
    %v316 = vadd.f32 %v252, %v315
    %v317 = vpop.f32.mrb[0].mxu0
    %318 = vmatprep.mubr.bf16.mxu0 0
    %319 = vmatmul.mubr.bf16.gmra.mrb[0].mxu0 %v188
    %v320 = vpop.f32.mrb[0].mxu0
    %v321 = vadd.f32 %v252, %v320
    %v322 = vpop.f32.mrb[0].mxu0
    %v323 = vpop.f32.mrb[0].mxu0
    %v324 = vadd.f32 %v252, %v323
    %v325 = vpop.f32.mrb[0].mxu0
    %326 = vdwg.mxu0
    %v327 = vpack.c.bf16 %v141, %v138
    %v328 = vpack.c.bf16 %v228, %v225
    %v329 = vpack.c.bf16 %v236, %v233
    %vm330 = vcmask 261120
    %v332 = vsel %vm330, %v327, 0
    %v335 = vsel %vm330, %v328, 0
    %v338 = vsel %vm330, %v329, 0
    %340 = vmatprep.subr.bf16.mxu0 0
    %341 = vmatpush1.bf16.xpose.msra.mxu0 %v335
    %342 = vmatprep.subr.bf16.mxu0 0
    %343 = vmatpush1.bf16.xpose.msra.mxu0 %v338
    %344 = vmatprep.subr.bf16.mxu0 0
    %345 = vmatpush1.bf16.xpose.msra.mxu0 0
    %346 = vmatprep.subr.bf16.mxu0 0
    %347 = vmatpush1.bf16.xpose.msra.mxu0 0
    %348 = vmatprep.subr.bf16.mxu0 0
    %349 = vmatpush1.bf16.xpose.msra.mxu0 0
    %350 = vmatprep.subr.bf16.mxu0 0
    %351 = vmatpush1.bf16.xpose.msra.mxu0 0
    %352 = vmatprep.subr.bf16.mxu0 0
    %353 = vmatpush1.bf16.xpose.msra.mxu0 0
    %354 = vmatprep.subr.bf16.mxu0 0
    %355 = vmatpush1.bf16.xpose.msra.mxu0 0
    %356 = vmatprep.subr.bf16.mxu0 0
    %357 = vmatpush1.bf16.xpose.msra.mxu0 0
    %358 = vmatprep.subr.bf16.mxu0 0
    %359 = vmatpush1.bf16.xpose.msra.mxu0 0
    %360 = vmatprep.subr.bf16.mxu0 0
    %361 = vmatpush1.bf16.xpose.msra.mxu0 0
    %362 = vmatprep.subr.bf16.mxu0 0
    %363 = vmatpush1.bf16.xpose.msra.mxu0 0
    %364 = vmatprep.subr.bf16.mxu0 0
    %365 = vmatpush1.bf16.xpose.msra.mxu0 0
    %366 = vmatprep.subr.bf16.mxu0 0
    %367 = vmatpush1.bf16.xpose.msra.mxu0 0
    %368 = vmatprep.subr.bf16.mxu0 0
    %369 = vmatpush1.bf16.xpose.msra.mxu0 0
    %370 = vmatprep.subr.bf16.mxu0 0
    %371 = vmatpush1.bf16.xpose.msra.mxu0 0
    %372 = vmatprep.mubr.bf16.mxu0 0
    %373 = vmatmul.mubr.bf16.gmra.mrb[0].mxu0 %v332
    %v374 = vpop.f32.mrb[0].mxu0
    %v375 = vadd.f32 0.0, %v374
    %v376 = vpop.f32.mrb[0].mxu0
    %v377 = vpop.f32.mrb[0].mxu0
    %v378 = vadd.f32 0.0, %v377
    %v379 = vpop.f32.mrb[0].mxu0
    %380 = vdwg.mxu0
    %v381 = vsel %vm330, %v375, -inf
    %382 = vmax.xlane.f32.xlu0 %v381
    %v383 = vpop.xlane.xlu0 %382
    %v384 = vsel %vm330, %v378, -inf
    %385 = vmax.xlane.f32.xlu0 %v384
    %v386 = vpop.xlane.xlu0 %385
    %v387 = vsub.f32 %v375, %v383
    %v388 = vsub.f32 %v378, %v386
    %v389 = vmul.f32 %v387, 1.442695
    %v390 = vpow.pop %v389
    %v391 = vmul.f32 %v388, 1.442695
    %v392 = vpow.pop %v391
    %v393 = vsel %vm330, %v390, 0.0
    %394 = vadd.xlane.f32.xlu0 %v393
    %v395 = vpop.xlane.xlu0 %394
    %v396 = vsel %vm330, %v392, 0.0
    %397 = vadd.xlane.f32.xlu0 %v396
    %v398 = vpop.xlane.xlu0 %397
    %v399 = vrcp.pop %v395
    %v400 = vrcp.pop %v398
    %v401 = vmul.f32 %v390, %v399
    %v402 = vmul.f32 %v392, %v400
    %v403 = vpack.c.bf16 %v402, %v401
    %v404 = vpack.c.bf16 %v316, %v313
    %v405 = vpack.c.bf16 %v324, %v321
    %v407 = vsel %vm330, %v403, 0
    %409 = vmatprep.subr.bf16.mxu0 0
    %410 = vmatpush1.bf16.msra.mxu0 %v404
    %411 = vmatprep.subr.bf16.mxu0 0
    %412 = vmatpush1.bf16.msra.mxu0 %v405
    %413 = vmatprep.subr.bf16.mxu0 0
    %414 = vmatpush1.bf16.msra.mxu0 0
    %415 = vmatprep.subr.bf16.mxu0 0
    %416 = vmatpush1.bf16.msra.mxu0 0
    %417 = vmatprep.subr.bf16.mxu0 0
    %418 = vmatpush1.bf16.msra.mxu0 0
    %419 = vmatprep.subr.bf16.mxu0 0
    %420 = vmatpush1.bf16.msra.mxu0 0
    %421 = vmatprep.subr.bf16.mxu0 0
    %422 = vmatpush1.bf16.msra.mxu0 0
    %423 = vmatprep.subr.bf16.mxu0 0
    %424 = vmatpush1.bf16.msra.mxu0 0
    %425 = vmatprep.subr.bf16.mxu0 0
    %426 = vmatpush1.bf16.msra.mxu0 0
    %427 = vmatprep.subr.bf16.mxu0 0
    %428 = vmatpush1.bf16.msra.mxu0 0
    %429 = vmatprep.subr.bf16.mxu0 0
    %430 = vmatpush1.bf16.msra.mxu0 0
    %431 = vmatprep.subr.bf16.mxu0 0
    %432 = vmatpush1.bf16.msra.mxu0 0
    %433 = vmatprep.subr.bf16.mxu0 0
    %434 = vmatpush1.bf16.msra.mxu0 0
    %435 = vmatprep.subr.bf16.mxu0 0
    %436 = vmatpush1.bf16.msra.mxu0 0
    %437 = vmatprep.subr.bf16.mxu0 0
    %438 = vmatpush1.bf16.msra.mxu0 0
    %439 = vmatprep.subr.bf16.mxu0 0
    %440 = vmatpush1.bf16.msra.mxu0 0
    %441 = vmatprep.mubr.bf16.mxu0 0
    %442 = vmatmul.mubr.bf16.gmra.mrb[0].mxu0 %v407
    %v443 = vpop.f32.mrb[0].mxu0
    %v444 = vadd.f32 0.0, %v443
    %v445 = vpop.f32.mrb[0].mxu0
    %v446 = vpop.f32.mrb[0].mxu0
    %v447 = vadd.f32 0.0, %v446
    %v448 = vpop.f32.mrb[0].mxu0
    %449 = vdwg.mxu0
    %v450 = vpack.c.bf16 %v447, %v444
    %451 = vst.msk [vmem:[#allocation2] sm:$0xff] %vm330, %v450
    %v452 = vld [vmem:[%s2] sm:$0xf]
    %v453 = vld [vmem:[%s2 + $0x4] sm:$0xf]
    %v454 = vld [vmem:[%s2 + $0x8] sm:$0xf]
    %v455 = vld [vmem:[%s2 + $0xc] sm:$0xf]
    %v456 = vld [vmem:[%s2 + $0x10] sm:$0xf]
    %v457 = vld [vmem:[%s2 + $0x14] sm:$0xf]
    %v458 = vld [vmem:[%s2 + $0x18] sm:$0xf]
    %v459 = vld [vmem:[%s2 + $0x1c] sm:$0xf]
    %v460 = vld [vmem:[%s2 + $0x20] sm:$0xf]
    %v461 = vld [vmem:[%s2 + $0x24] sm:$0xf]
    %v462 = vld [vmem:[%s2 + $0x28] sm:$0xf]
    %v463 = vld [vmem:[%s2 + $0x2c] sm:$0xf]
    %v464 = vld [vmem:[%s2 + $0x30] sm:$0xf]
    %v465 = vld [vmem:[%s2 + $0x34] sm:$0xf]
    %v466 = vld [vmem:[%s2 + $0x38] sm:$0xf]
    %v467 = vld [vmem:[%s2 + $0x3c] sm:$0xf]
    %v484 = vunpack.c.l.b16 %v452
    %v485 = vunpack.c.l.b16 %v453
    %v486 = vunpack.c.l.b16 %v454
    %v487 = vunpack.c.l.b16 %v455
    %v488 = vunpack.c.l.b16 %v456
    %v489 = vunpack.c.l.b16 %v457
    %v490 = vunpack.c.l.b16 %v458
    %v491 = vunpack.c.l.b16 %v459
    %v492 = vunpack.c.l.b16 %v460
    %v493 = vunpack.c.l.b16 %v461
    %v494 = vunpack.c.l.b16 %v462
    %v495 = vunpack.c.l.b16 %v463
    %v496 = vunpack.c.l.b16 %v464
    %v497 = vunpack.c.l.b16 %v465
    %v498 = vunpack.c.l.b16 %v466
    %v499 = vunpack.c.l.b16 %v467
    %v500 = vpack.c.b16 %v485, %v484
    %v501 = vpack.c.b16 %v487, %v486
    %v502 = vpack.c.b16 %v489, %v488
    %v503 = vpack.c.b16 %v491, %v490
    %v504 = vpack.c.b16 %v493, %v492
    %v505 = vpack.c.b16 %v495, %v494
    %v506 = vpack.c.b16 %v497, %v496
    %v507 = vpack.c.b16 %v499, %v498
    %508 = vrot.lane.b32.xlu0 %v500, 96
    %v509 = vpop.permute.xlu0 %508
    %510 = vrot.lane.b32.xlu0 %v501, 96
    %v511 = vpop.permute.xlu0 %510
    %512 = vrot.lane.b32.xlu0 %v502, 96
    %v513 = vpop.permute.xlu0 %512
    %514 = vrot.lane.b32.xlu0 %v503, 96
    %v515 = vpop.permute.xlu0 %514
    %516 = vrot.lane.b32.xlu0 %v504, 96
    %v517 = vpop.permute.xlu0 %516
    %518 = vrot.lane.b32.xlu0 %v505, 96
    %v519 = vpop.permute.xlu0 %518
    %520 = vrot.lane.b32.xlu0 %v506, 96
    %v521 = vpop.permute.xlu0 %520
    %522 = vrot.lane.b32.xlu0 %v507, 96
    %v523 = vpop.permute.xlu0 %522
    %532 = vmatprep.subr.bf16.mxu0 0
    %533 = vmatpush1.bf16.msra.mxu0 %v509
    %534 = vmatprep.subr.bf16.mxu0 0
    %535 = vmatpush1.bf16.msra.mxu0 %v511
    %536 = vmatprep.subr.bf16.mxu0 0
    %537 = vmatpush1.bf16.msra.mxu0 %v513
    %538 = vmatprep.subr.bf16.mxu0 0
    %539 = vmatpush1.bf16.msra.mxu0 %v515
    %540 = vmatprep.subr.bf16.mxu0 0
    %541 = vmatpush1.bf16.msra.mxu0 %v517
    %542 = vmatprep.subr.bf16.mxu0 0
    %543 = vmatpush1.bf16.msra.mxu0 %v519
    %544 = vmatprep.subr.bf16.mxu0 0
    %545 = vmatpush1.bf16.msra.mxu0 %v521
    %546 = vmatprep.subr.bf16.mxu0 0
    %547 = vmatpush1.bf16.msra.mxu0 %v523
    %548 = vmatprep.subr.bf16.mxu0 0
    %549 = vmatpush1.bf16.msra.mxu0 0
    %550 = vmatprep.subr.bf16.mxu0 0
    %551 = vmatpush1.bf16.msra.mxu0 0
    %552 = vmatprep.subr.bf16.mxu0 0
    %553 = vmatpush1.bf16.msra.mxu0 0
    %554 = vmatprep.subr.bf16.mxu0 0
    %555 = vmatpush1.bf16.msra.mxu0 0
    %556 = vmatprep.subr.bf16.mxu0 0
    %557 = vmatpush1.bf16.msra.mxu0 0
    %558 = vmatprep.subr.bf16.mxu0 0
    %559 = vmatpush1.bf16.msra.mxu0 0
    %560 = vmatprep.subr.bf16.mxu0 0
    %561 = vmatpush1.bf16.msra.mxu0 0
    %562 = vmatprep.subr.bf16.mxu0 0
    %563 = vmatpush1.bf16.msra.mxu0 0
    %564 = vmatprep.mubr.bf16.mxu0 0
    %565 = vmatmul.mubr.bf16.gmra.mrb[0].mxu0 %v32
    %v566 = vpop.f32.mrb[0].mxu0
    %v567 = vadd.f32 0.0, %v566
    %v568 = vpop.f32.mrb[0].mxu0
    %v569 = vpop.f32.mrb[0].mxu0
    %v570 = vadd.f32 0.0, %v569
    %v571 = vpop.f32.mrb[0].mxu0
    %572 = vdwg.mxu0
    %v573 = vld [vmem:[%s3] sm:$0xf]
    %v574 = vld [vmem:[%s3 + $0x8] sm:$0xf]
    %v575 = vld [vmem:[%s3 + $0x10] sm:$0xf]
    %v576 = vld [vmem:[%s3 + $0x18] sm:$0xf]
    %v577 = vld [vmem:[%s3 + $0x20] sm:$0xf]
    %v578 = vld [vmem:[%s3 + $0x28] sm:$0xf]
    %v579 = vld [vmem:[%s3 + $0x30] sm:$0xf]
    %v580 = vld [vmem:[%s3 + $0x38] sm:$0xf]
    %v581 = vld [vmem:[%s4] sm:$0x1]
    %v583 = vlaneseq
    %v584 = vshrl.u32 %v583, 7
    %v585 = vsub.s32 0, %v584
    %v586 = vrot.slane %v581, %v585
    %v595 = vunpack.c.l.b16 %v573
    %v596 = vunpack.c.l.b16 %v574
    %v597 = vunpack.c.l.b16 %v575
    %v598 = vunpack.c.l.b16 %v576
    %v599 = vunpack.c.l.b16 %v577
    %v600 = vunpack.c.l.b16 %v578
    %v601 = vunpack.c.l.b16 %v579
    %v602 = vunpack.c.l.b16 %v580
    %v603 = vpack.c.b16 %v596, %v595
    %v604 = vpack.c.b16 %v598, %v597
    %v605 = vpack.c.b16 %v600, %v599
    %v606 = vpack.c.b16 %v602, %v601
    %607 = vrot.lane.b32.xlu0 %v603, 96
    %v608 = vpop.permute.xlu0 %607
    %609 = vrot.lane.b32.xlu0 %v604, 96
    %v610 = vpop.permute.xlu0 %609
    %611 = vrot.lane.b32.xlu0 %v605, 96
    %v612 = vpop.permute.xlu0 %611
    %613 = vrot.lane.b32.xlu0 %v606, 96
    %v614 = vpop.permute.xlu0 %613
    %619 = vrot.lane.b32.xlu0 %v586, 96
    %v620 = vpop.permute.xlu0 %619
    %622 = vmatprep.subr.bf16.mxu0 0
    %623 = vmatpush1.bf16.msra.mxu0 %v608
    %624 = vmatprep.subr.bf16.mxu0 0
    %625 = vmatpush1.bf16.msra.mxu0 %v610
    %626 = vmatprep.subr.bf16.mxu0 0
    %627 = vmatpush1.bf16.msra.mxu0 %v612
    %628 = vmatprep.subr.bf16.mxu0 0
    %629 = vmatpush1.bf16.msra.mxu0 %v614
    %630 = vmatprep.subr.bf16.mxu0 0
    %631 = vmatpush1.bf16.msra.mxu0 0
    %632 = vmatprep.subr.bf16.mxu0 0
    %633 = vmatpush1.bf16.msra.mxu0 0
    %634 = vmatprep.subr.bf16.mxu0 0
    %635 = vmatpush1.bf16.msra.mxu0 0
    %636 = vmatprep.subr.bf16.mxu0 0
    %637 = vmatpush1.bf16.msra.mxu0 0
    %638 = vmatprep.subr.bf16.mxu0 0
    %639 = vmatpush1.bf16.msra.mxu0 0
    %640 = vmatprep.subr.bf16.mxu0 0
    %641 = vmatpush1.bf16.msra.mxu0 0
    %642 = vmatprep.subr.bf16.mxu0 0
    %643 = vmatpush1.bf16.msra.mxu0 0
    %644 = vmatprep.subr.bf16.mxu0 0
    %645 = vmatpush1.bf16.msra.mxu0 0
    %646 = vmatprep.subr.bf16.mxu0 0
    %647 = vmatpush1.bf16.msra.mxu0 0
    %648 = vmatprep.subr.bf16.mxu0 0
    %649 = vmatpush1.bf16.msra.mxu0 0
    %650 = vmatprep.subr.bf16.mxu0 0
    %651 = vmatpush1.bf16.msra.mxu0 0
    %652 = vmatprep.subr.bf16.mxu0 0
    %653 = vmatpush1.bf16.msra.mxu0 0
    %654 = vmatprep.mubr.bf16.mxu0 0
    %655 = vmatmul.mubr.bf16.gmra.mrb[0].mxu0 %v185
    %v656 = vpop.f32.mrb[0].mxu0
    %v657 = vadd.f32 %v620, %v656
    %v658 = vpop.f32.mrb[0].mxu0
    %v659 = vpop.f32.mrb[0].mxu0
    %v660 = vadd.f32 %v620, %v659
    %v661 = vpop.f32.mrb[0].mxu0
    %662 = vmatprep.mubr.bf16.mxu0 0
    %663 = vmatmul.mubr.bf16.gmra.mrb[0].mxu0 %v188
    %v664 = vpop.f32.mrb[0].mxu0
    %v665 = vadd.f32 %v620, %v664
    %v666 = vpop.f32.mrb[0].mxu0
    %v667 = vpop.f32.mrb[0].mxu0
    %v668 = vadd.f32 %v620, %v667
    %v669 = vpop.f32.mrb[0].mxu0
    %670 = vdwg.mxu0
    %v671 = vld [vmem:[%s3 + $0x4] sm:$0xf]
    %v672 = vld [vmem:[%s3 + $0xc] sm:$0xf]
    %v673 = vld [vmem:[%s3 + $0x14] sm:$0xf]
    %v674 = vld [vmem:[%s3 + $0x1c] sm:$0xf]
    %v675 = vld [vmem:[%s3 + $0x24] sm:$0xf]
    %v676 = vld [vmem:[%s3 + $0x2c] sm:$0xf]
    %v677 = vld [vmem:[%s3 + $0x34] sm:$0xf]
    %v678 = vld [vmem:[%s3 + $0x3c] sm:$0xf]
    %v679 = vld [vmem:[%s4 + $0x1] sm:$0x1]
    %v681 = vlaneseq
    %v682 = vshrl.u32 %v681, 7
    %v683 = vsub.s32 0, %v682
    %v684 = vrot.slane %v679, %v683
    %v693 = vunpack.c.l.b16 %v671
    %v694 = vunpack.c.l.b16 %v672
    %v695 = vunpack.c.l.b16 %v673
    %v696 = vunpack.c.l.b16 %v674
    %v697 = vunpack.c.l.b16 %v675
    %v698 = vunpack.c.l.b16 %v676
    %v699 = vunpack.c.l.b16 %v677
    %v700 = vunpack.c.l.b16 %v678
    %v701 = vpack.c.b16 %v694, %v693
    %v702 = vpack.c.b16 %v696, %v695
    %v703 = vpack.c.b16 %v698, %v697
    %v704 = vpack.c.b16 %v700, %v699
    %705 = vrot.lane.b32.xlu0 %v701, 96
    %v706 = vpop.permute.xlu0 %705
    %707 = vrot.lane.b32.xlu0 %v702, 96
    %v708 = vpop.permute.xlu0 %707
    %709 = vrot.lane.b32.xlu0 %v703, 96
    %v710 = vpop.permute.xlu0 %709
    %711 = vrot.lane.b32.xlu0 %v704, 96
    %v712 = vpop.permute.xlu0 %711
    %717 = vrot.lane.b32.xlu0 %v684, 96
    %v718 = vpop.permute.xlu0 %717
    %720 = vmatprep.subr.bf16.mxu0 0
    %721 = vmatpush1.bf16.msra.mxu0 %v706
    %722 = vmatprep.subr.bf16.mxu0 0
    %723 = vmatpush1.bf16.msra.mxu0 %v708
    %724 = vmatprep.subr.bf16.mxu0 0
    %725 = vmatpush1.bf16.msra.mxu0 %v710
    %726 = vmatprep.subr.bf16.mxu0 0
    %727 = vmatpush1.bf16.msra.mxu0 %v712
    %728 = vmatprep.subr.bf16.mxu0 0
    %729 = vmatpush1.bf16.msra.mxu0 0
    %730 = vmatprep.subr.bf16.mxu0 0
    %731 = vmatpush1.bf16.msra.mxu0 0
    %732 = vmatprep.subr.bf16.mxu0 0
    %733 = vmatpush1.bf16.msra.mxu0 0
    %734 = vmatprep.subr.bf16.mxu0 0
    %735 = vmatpush1.bf16.msra.mxu0 0
    %736 = vmatprep.subr.bf16.mxu0 0
    %737 = vmatpush1.bf16.msra.mxu0 0
    %738 = vmatprep.subr.bf16.mxu0 0
    %739 = vmatpush1.bf16.msra.mxu0 0
    %740 = vmatprep.subr.bf16.mxu0 0
    %741 = vmatpush1.bf16.msra.mxu0 0
    %742 = vmatprep.subr.bf16.mxu0 0
    %743 = vmatpush1.bf16.msra.mxu0 0
    %744 = vmatprep.subr.bf16.mxu0 0
    %745 = vmatpush1.bf16.msra.mxu0 0
    %746 = vmatprep.subr.bf16.mxu0 0
    %747 = vmatpush1.bf16.msra.mxu0 0
    %748 = vmatprep.subr.bf16.mxu0 0
    %749 = vmatpush1.bf16.msra.mxu0 0
    %750 = vmatprep.subr.bf16.mxu0 0
    %751 = vmatpush1.bf16.msra.mxu0 0
    %752 = vmatprep.mubr.bf16.mxu0 0
    %753 = vmatmul.mubr.bf16.gmra.mrb[0].mxu0 %v185
    %v754 = vpop.f32.mrb[0].mxu0
    %v755 = vadd.f32 %v718, %v754
    %v756 = vpop.f32.mrb[0].mxu0
    %v757 = vpop.f32.mrb[0].mxu0
    %v758 = vadd.f32 %v718, %v757
    %v759 = vpop.f32.mrb[0].mxu0
    %760 = vmatprep.mubr.bf16.mxu0 0
    %761 = vmatmul.mubr.bf16.gmra.mrb[0].mxu0 %v188
    %v762 = vpop.f32.mrb[0].mxu0
    %v763 = vadd.f32 %v718, %v762
    %v764 = vpop.f32.mrb[0].mxu0
    %v765 = vpop.f32.mrb[0].mxu0
    %v766 = vadd.f32 %v718, %v765
    %v767 = vpop.f32.mrb[0].mxu0
    %768 = vdwg.mxu0
    %v769 = vpack.c.bf16 %v570, %v567
    %v770 = vpack.c.bf16 %v660, %v657
    %v771 = vpack.c.bf16 %v668, %v665
    %v773 = vsel %vm330, %v769, 0
    %v776 = vsel %vm330, %v770, 0
    %v779 = vsel %vm330, %v771, 0
    %781 = vmatprep.subr.bf16.mxu0 0
    %782 = vmatpush1.bf16.xpose.msra.mxu0 %v776
    %783 = vmatprep.subr.bf16.mxu0 0
    %784 = vmatpush1.bf16.xpose.msra.mxu0 %v779
    %785 = vmatprep.subr.bf16.mxu0 0
    %786 = vmatpush1.bf16.xpose.msra.mxu0 0
    %787 = vmatprep.subr.bf16.mxu0 0
    %788 = vmatpush1.bf16.xpose.msra.mxu0 0
    %789 = vmatprep.subr.bf16.mxu0 0
    %790 = vmatpush1.bf16.xpose.msra.mxu0 0
    %791 = vmatprep.subr.bf16.mxu0 0
    %792 = vmatpush1.bf16.xpose.msra.mxu0 0
    %793 = vmatprep.subr.bf16.mxu0 0
    %794 = vmatpush1.bf16.xpose.msra.mxu0 0
    %795 = vmatprep.subr.bf16.mxu0 0
    %796 = vmatpush1.bf16.xpose.msra.mxu0 0
    %797 = vmatprep.subr.bf16.mxu0 0
    %798 = vmatpush1.bf16.xpose.msra.mxu0 0
    %799 = vmatprep.subr.bf16.mxu0 0
    %800 = vmatpush1.bf16.xpose.msra.mxu0 0
    %801 = vmatprep.subr.bf16.mxu0 0
    %802 = vmatpush1.bf16.xpose.msra.mxu0 0
    %803 = vmatprep.subr.bf16.mxu0 0
    %804 = vmatpush1.bf16.xpose.msra.mxu0 0
    %805 = vmatprep.subr.bf16.mxu0 0
    %806 = vmatpush1.bf16.xpose.msra.mxu0 0
    %807 = vmatprep.subr.bf16.mxu0 0
    %808 = vmatpush1.bf16.xpose.msra.mxu0 0
    %809 = vmatprep.subr.bf16.mxu0 0
    %810 = vmatpush1.bf16.xpose.msra.mxu0 0
    %811 = vmatprep.subr.bf16.mxu0 0
    %812 = vmatpush1.bf16.xpose.msra.mxu0 0
    %813 = vmatprep.mubr.bf16.mxu0 0
    %814 = vmatmul.mubr.bf16.gmra.mrb[0].mxu0 %v773
    %v815 = vpop.f32.mrb[0].mxu0
    %v816 = vadd.f32 0.0, %v815
    %v817 = vpop.f32.mrb[0].mxu0
    %v818 = vpop.f32.mrb[0].mxu0
    %v819 = vadd.f32 0.0, %v818
    %v820 = vpop.f32.mrb[0].mxu0
    %821 = vdwg.mxu0
    %v822 = vsel %vm330, %v816, -inf
    %823 = vmax.xlane.f32.xlu0 %v822
    %v824 = vpop.xlane.xlu0 %823
    %v825 = vsel %vm330, %v819, -inf
    %826 = vmax.xlane.f32.xlu0 %v825
    %v827 = vpop.xlane.xlu0 %826
    %v828 = vsub.f32 %v816, %v824
    %v829 = vsub.f32 %v819, %v827
    %v830 = vmul.f32 %v828, 1.442695
    %v831 = vpow.pop %v830
    %v832 = vmul.f32 %v829, 1.442695
    %v833 = vpow.pop %v832
    %v834 = vsel %vm330, %v831, 0.0
    %835 = vadd.xlane.f32.xlu0 %v834
    %v836 = vpop.xlane.xlu0 %835
    %v837 = vsel %vm330, %v833, 0.0
    %838 = vadd.xlane.f32.xlu0 %v837
    %v839 = vpop.xlane.xlu0 %838
    %v840 = vrcp.pop %v836
    %v841 = vrcp.pop %v839
    %v842 = vmul.f32 %v831, %v840
    %v843 = vmul.f32 %v833, %v841
    %v844 = vpack.c.bf16 %v843, %v842
    %v845 = vpack.c.bf16 %v758, %v755
    %v846 = vpack.c.bf16 %v766, %v763
    %v848 = vsel %vm330, %v844, 0
    %850 = vmatprep.subr.bf16.mxu0 0
    %851 = vmatpush1.bf16.msra.mxu0 %v845
    %852 = vmatprep.subr.bf16.mxu0 0
    %853 = vmatpush1.bf16.msra.mxu0 %v846
    %854 = vmatprep.subr.bf16.mxu0 0
    %855 = vmatpush1.bf16.msra.mxu0 0
    %856 = vmatprep.subr.bf16.mxu0 0
    %857 = vmatpush1.bf16.msra.mxu0 0
    %858 = vmatprep.subr.bf16.mxu0 0
    %859 = vmatpush1.bf16.msra.mxu0 0
    %860 = vmatprep.subr.bf16.mxu0 0
    %861 = vmatpush1.bf16.msra.mxu0 0
    %862 = vmatprep.subr.bf16.mxu0 0
    %863 = vmatpush1.bf16.msra.mxu0 0
    %864 = vmatprep.subr.bf16.mxu0 0
    %865 = vmatpush1.bf16.msra.mxu0 0
    %866 = vmatprep.subr.bf16.mxu0 0
    %867 = vmatpush1.bf16.msra.mxu0 0
    %868 = vmatprep.subr.bf16.mxu0 0
    %869 = vmatpush1.bf16.msra.mxu0 0
    %870 = vmatprep.subr.bf16.mxu0 0
    %871 = vmatpush1.bf16.msra.mxu0 0
    %872 = vmatprep.subr.bf16.mxu0 0
    %873 = vmatpush1.bf16.msra.mxu0 0
    %874 = vmatprep.subr.bf16.mxu0 0
    %875 = vmatpush1.bf16.msra.mxu0 0
    %876 = vmatprep.subr.bf16.mxu0 0
    %877 = vmatpush1.bf16.msra.mxu0 0
    %878 = vmatprep.subr.bf16.mxu0 0
    %879 = vmatpush1.bf16.msra.mxu0 0
    %880 = vmatprep.subr.bf16.mxu0 0
    %881 = vmatpush1.bf16.msra.mxu0 0
    %882 = vmatprep.mubr.bf16.mxu0 0
    %883 = vmatmul.mubr.bf16.gmra.mrb[0].mxu0 %v848
    %v884 = vpop.f32.mrb[0].mxu0
    %v885 = vadd.f32 0.0, %v884
    %v886 = vpop.f32.mrb[0].mxu0
    %v887 = vpop.f32.mrb[0].mxu0
    %v888 = vadd.f32 0.0, %v887
    %v889 = vpop.f32.mrb[0].mxu0
    %890 = vdwg.mxu0
    %v891 = vpack.c.bf16 %v888, %v885
    %893 = vrot.lane.b32.xlu0 %v891, 32
    %v894 = vpop.permute.xlu0 %893
    %vm896 = vcmask 523520
    %897 = vst.msk [vmem:[#allocation2] sm:$0xff] %vm896, %v894
    %v898 = vld [vmem:[%s2] sm:$0xf]
    %v899 = vld [vmem:[%s2 + $0x4] sm:$0xf]
    %v900 = vld [vmem:[%s2 + $0x8] sm:$0xf]
    %v901 = vld [vmem:[%s2 + $0xc] sm:$0xf]
    %v902 = vld [vmem:[%s2 + $0x10] sm:$0xf]
    %v903 = vld [vmem:[%s2 + $0x14] sm:$0xf]
    %v904 = vld [vmem:[%s2 + $0x18] sm:$0xf]
    %v905 = vld [vmem:[%s2 + $0x1c] sm:$0xf]
    %v906 = vld [vmem:[%s2 + $0x20] sm:$0xf]
    %v907 = vld [vmem:[%s2 + $0x24] sm:$0xf]
    %v908 = vld [vmem:[%s2 + $0x28] sm:$0xf]
    %v909 = vld [vmem:[%s2 + $0x2c] sm:$0xf]
    %v910 = vld [vmem:[%s2 + $0x30] sm:$0xf]
    %v911 = vld [vmem:[%s2 + $0x34] sm:$0xf]
    %v912 = vld [vmem:[%s2 + $0x38] sm:$0xf]
    %v913 = vld [vmem:[%s2 + $0x3c] sm:$0xf]
    %v930 = vunpack.c.l.b16 %v898
    %v931 = vunpack.c.l.b16 %v899
    %v932 = vunpack.c.l.b16 %v900
    %v933 = vunpack.c.l.b16 %v901
    %v934 = vunpack.c.l.b16 %v902
    %v935 = vunpack.c.l.b16 %v903
    %v936 = vunpack.c.l.b16 %v904
    %v937 = vunpack.c.l.b16 %v905
    %v938 = vunpack.c.l.b16 %v906
    %v939 = vunpack.c.l.b16 %v907
    %v940 = vunpack.c.l.b16 %v908
    %v941 = vunpack.c.l.b16 %v909
    %v942 = vunpack.c.l.b16 %v910
    %v943 = vunpack.c.l.b16 %v911
    %v944 = vunpack.c.l.b16 %v912
    %v945 = vunpack.c.l.b16 %v913
    %v946 = vpack.c.b16 %v931, %v930
    %v947 = vpack.c.b16 %v933, %v932
    %v948 = vpack.c.b16 %v935, %v934
    %v949 = vpack.c.b16 %v937, %v936
    %v950 = vpack.c.b16 %v939, %v938
    %v951 = vpack.c.b16 %v941, %v940
    %v952 = vpack.c.b16 %v943, %v942
    %v953 = vpack.c.b16 %v945, %v944
    %954 = vrot.lane.b32.xlu0 %v946, 64
    %v955 = vpop.permute.xlu0 %954
    %956 = vrot.lane.b32.xlu0 %v947, 64
    %v957 = vpop.permute.xlu0 %956
    %958 = vrot.lane.b32.xlu0 %v948, 64
    %v959 = vpop.permute.xlu0 %958
    %960 = vrot.lane.b32.xlu0 %v949, 64
    %v961 = vpop.permute.xlu0 %960
    %962 = vrot.lane.b32.xlu0 %v950, 64
    %v963 = vpop.permute.xlu0 %962
    %964 = vrot.lane.b32.xlu0 %v951, 64
    %v965 = vpop.permute.xlu0 %964
    %966 = vrot.lane.b32.xlu0 %v952, 64
    %v967 = vpop.permute.xlu0 %966
    %968 = vrot.lane.b32.xlu0 %v953, 64
    %v969 = vpop.permute.xlu0 %968
    %978 = vmatprep.subr.bf16.mxu0 0
    %979 = vmatpush1.bf16.msra.mxu0 %v955
    %980 = vmatprep.subr.bf16.mxu0 0
    %981 = vmatpush1.bf16.msra.mxu0 %v957
    %982 = vmatprep.subr.bf16.mxu0 0
    %983 = vmatpush1.bf16.msra.mxu0 %v959
    %984 = vmatprep.subr.bf16.mxu0 0
    %985 = vmatpush1.bf16.msra.mxu0 %v961
    %986 = vmatprep.subr.bf16.mxu0 0
    %987 = vmatpush1.bf16.msra.mxu0 %v963
    %988 = vmatprep.subr.bf16.mxu0 0
    %989 = vmatpush1.bf16.msra.mxu0 %v965
    %990 = vmatprep.subr.bf16.mxu0 0
    %991 = vmatpush1.bf16.msra.mxu0 %v967
    %992 = vmatprep.subr.bf16.mxu0 0
    %993 = vmatpush1.bf16.msra.mxu0 %v969
    %994 = vmatprep.subr.bf16.mxu0 0
    %995 = vmatpush1.bf16.msra.mxu0 0
    %996 = vmatprep.subr.bf16.mxu0 0
    %997 = vmatpush1.bf16.msra.mxu0 0
    %998 = vmatprep.subr.bf16.mxu0 0
    %999 = vmatpush1.bf16.msra.mxu0 0
    %1000 = vmatprep.subr.bf16.mxu0 0
    %1001 = vmatpush1.bf16.msra.mxu0 0
    %1002 = vmatprep.subr.bf16.mxu0 0
    %1003 = vmatpush1.bf16.msra.mxu0 0
    %1004 = vmatprep.subr.bf16.mxu0 0
    %1005 = vmatpush1.bf16.msra.mxu0 0
    %1006 = vmatprep.subr.bf16.mxu0 0
    %1007 = vmatpush1.bf16.msra.mxu0 0
    %1008 = vmatprep.subr.bf16.mxu0 0
    %1009 = vmatpush1.bf16.msra.mxu0 0
    %1010 = vmatprep.mubr.bf16.mxu0 0
    %1011 = vmatmul.mubr.bf16.gmra.mrb[0].mxu0 %v32
    %v1012 = vpop.f32.mrb[0].mxu0
    %v1013 = vadd.f32 0.0, %v1012
    %v1014 = vpop.f32.mrb[0].mxu0
    %v1015 = vpop.f32.mrb[0].mxu0
    %v1016 = vadd.f32 0.0, %v1015
    %v1017 = vpop.f32.mrb[0].mxu0
    %1018 = vdwg.mxu0
    %v1019 = vld [vmem:[%s3] sm:$0xf]
    %v1020 = vld [vmem:[%s3 + $0x8] sm:$0xf]
    %v1021 = vld [vmem:[%s3 + $0x10] sm:$0xf]
    %v1022 = vld [vmem:[%s3 + $0x18] sm:$0xf]
    %v1023 = vld [vmem:[%s3 + $0x20] sm:$0xf]
    %v1024 = vld [vmem:[%s3 + $0x28] sm:$0xf]
    %v1025 = vld [vmem:[%s3 + $0x30] sm:$0xf]
    %v1026 = vld [vmem:[%s3 + $0x38] sm:$0xf]
    %v1027 = vld [vmem:[%s4] sm:$0x1]
    %v1029 = vlaneseq
    %v1030 = vshrl.u32 %v1029, 7
    %v1031 = vsub.s32 0, %v1030
    %v1032 = vrot.slane %v1027, %v1031
    %v1041 = vunpack.c.l.b16 %v1019
    %v1042 = vunpack.c.l.b16 %v1020
    %v1043 = vunpack.c.l.b16 %v1021
    %v1044 = vunpack.c.l.b16 %v1022
    %v1045 = vunpack.c.l.b16 %v1023
    %v1046 = vunpack.c.l.b16 %v1024
    %v1047 = vunpack.c.l.b16 %v1025
    %v1048 = vunpack.c.l.b16 %v1026
    %v1049 = vpack.c.b16 %v1042, %v1041
    %v1050 = vpack.c.b16 %v1044, %v1043
    %v1051 = vpack.c.b16 %v1046, %v1045
    %v1052 = vpack.c.b16 %v1048, %v1047
    %1053 = vrot.lane.b32.xlu0 %v1049, 64
    %v1054 = vpop.permute.xlu0 %1053
    %1055 = vrot.lane.b32.xlu0 %v1050, 64
    %v1056 = vpop.permute.xlu0 %1055
    %1057 = vrot.lane.b32.xlu0 %v1051, 64
    %v1058 = vpop.permute.xlu0 %1057
    %1059 = vrot.lane.b32.xlu0 %v1052, 64
    %v1060 = vpop.permute.xlu0 %1059
    %1065 = vrot.lane.b32.xlu0 %v1032, 64
    %v1066 = vpop.permute.xlu0 %1065
    %1068 = vmatprep.subr.bf16.mxu0 0
    %1069 = vmatpush1.bf16.msra.mxu0 %v1054
    %1070 = vmatprep.subr.bf16.mxu0 0
    %1071 = vmatpush1.bf16.msra.mxu0 %v1056
    %1072 = vmatprep.subr.bf16.mxu0 0
    %1073 = vmatpush1.bf16.msra.mxu0 %v1058
    %1074 = vmatprep.subr.bf16.mxu0 0
    %1075 = vmatpush1.bf16.msra.mxu0 %v1060
    %1076 = vmatprep.subr.bf16.mxu0 0
    %1077 = vmatpush1.bf16.msra.mxu0 0
    %1078 = vmatprep.subr.bf16.mxu0 0
    %1079 = vmatpush1.bf16.msra.mxu0 0
    %1080 = vmatprep.subr.bf16.mxu0 0
    %1081 = vmatpush1.bf16.msra.mxu0 0
    %1082 = vmatprep.subr.bf16.mxu0 0
    %1083 = vmatpush1.bf16.msra.mxu0 0
    %1084 = vmatprep.subr.bf16.mxu0 0
    %1085 = vmatpush1.bf16.msra.mxu0 0
    %1086 = vmatprep.subr.bf16.mxu0 0
    %1087 = vmatpush1.bf16.msra.mxu0 0
    %1088 = vmatprep.subr.bf16.mxu0 0
    %1089 = vmatpush1.bf16.msra.mxu0 0
    %1090 = vmatprep.subr.bf16.mxu0 0
    %1091 = vmatpush1.bf16.msra.mxu0 0
    %1092 = vmatprep.subr.bf16.mxu0 0
    %1093 = vmatpush1.bf16.msra.mxu0 0
    %1094 = vmatprep.subr.bf16.mxu0 0
    %1095 = vmatpush1.bf16.msra.mxu0 0
    %1096 = vmatprep.subr.bf16.mxu0 0
    %1097 = vmatpush1.bf16.msra.mxu0 0
    %1098 = vmatprep.subr.bf16.mxu0 0
    %1099 = vmatpush1.bf16.msra.mxu0 0
    %1100 = vmatprep.mubr.bf16.mxu0 0
    %1101 = vmatmul.mubr.bf16.gmra.mrb[0].mxu0 %v185
    %v1102 = vpop.f32.mrb[0].mxu0
    %v1103 = vadd.f32 %v1066, %v1102
    %v1104 = vpop.f32.mrb[0].mxu0
    %v1105 = vpop.f32.mrb[0].mxu0
    %v1106 = vadd.f32 %v1066, %v1105
    %v1107 = vpop.f32.mrb[0].mxu0
    %1108 = vmatprep.mubr.bf16.mxu0 0
    %1109 = vmatmul.mubr.bf16.gmra.mrb[0].mxu0 %v188
    %v1110 = vpop.f32.mrb[0].mxu0
    %v1111 = vadd.f32 %v1066, %v1110
    %v1112 = vpop.f32.mrb[0].mxu0
    %v1113 = vpop.f32.mrb[0].mxu0
    %v1114 = vadd.f32 %v1066, %v1113
    %v1115 = vpop.f32.mrb[0].mxu0
    %1116 = vdwg.mxu0
    %v1117 = vld [vmem:[%s3 + $0x4] sm:$0xf]
    %v1118 = vld [vmem:[%s3 + $0xc] sm:$0xf]
    %v1119 = vld [vmem:[%s3 + $0x14] sm:$0xf]
    %v1120 = vld [vmem:[%s3 + $0x1c] sm:$0xf]
    %v1121 = vld [vmem:[%s3 + $0x24] sm:$0xf]
    %v1122 = vld [vmem:[%s3 + $0x2c] sm:$0xf]
    %v1123 = vld [vmem:[%s3 + $0x34] sm:$0xf]
    %v1124 = vld [vmem:[%s3 + $0x3c] sm:$0xf]
    %v1125 = vld [vmem:[%s4 + $0x1] sm:$0x1]
    %v1127 = vlaneseq
    %v1128 = vshrl.u32 %v1127, 7
    %v1129 = vsub.s32 0, %v1128
    %v1130 = vrot.slane %v1125, %v1129
    %v1139 = vunpack.c.l.b16 %v1117
    %v1140 = vunpack.c.l.b16 %v1118
    %v1141 = vunpack.c.l.b16 %v1119
    %v1142 = vunpack.c.l.b16 %v1120
    %v1143 = vunpack.c.l.b16 %v1121
    %v1144 = vunpack.c.l.b16 %v1122
    %v1145 = vunpack.c.l.b16 %v1123
    %v1146 = vunpack.c.l.b16 %v1124
    %v1147 = vpack.c.b16 %v1140, %v1139
    %v1148 = vpack.c.b16 %v1142, %v1141
    %v1149 = vpack.c.b16 %v1144, %v1143
    %v1150 = vpack.c.b16 %v1146, %v1145
    %1151 = vrot.lane.b32.xlu0 %v1147, 64
    %v1152 = vpop.permute.xlu0 %1151
    %1153 = vrot.lane.b32.xlu0 %v1148, 64
    %v1154 = vpop.permute.xlu0 %1153
    %1155 = vrot.lane.b32.xlu0 %v1149, 64
    %v1156 = vpop.permute.xlu0 %1155
    %1157 = vrot.lane.b32.xlu0 %v1150, 64
    %v1158 = vpop.permute.xlu0 %1157
    %1163 = vrot.lane.b32.xlu0 %v1130, 64
    %v1164 = vpop.permute.xlu0 %1163
    %1166 = vmatprep.subr.bf16.mxu0 0
    %1167 = vmatpush1.bf16.msra.mxu0 %v1152
    %1168 = vmatprep.subr.bf16.mxu0 0
    %1169 = vmatpush1.bf16.msra.mxu0 %v1154
    %1170 = vmatprep.subr.bf16.mxu0 0
    %1171 = vmatpush1.bf16.msra.mxu0 %v1156
    %1172 = vmatprep.subr.bf16.mxu0 0
    %1173 = vmatpush1.bf16.msra.mxu0 %v1158
    %1174 = vmatprep.subr.bf16.mxu0 0
    %1175 = vmatpush1.bf16.msra.mxu0 0
    %1176 = vmatprep.subr.bf16.mxu0 0
    %1177 = vmatpush1.bf16.msra.mxu0 0
    %1178 = vmatprep.subr.bf16.mxu0 0
    %1179 = vmatpush1.bf16.msra.mxu0 0
    %1180 = vmatprep.subr.bf16.mxu0 0
    %1181 = vmatpush1.bf16.msra.mxu0 0
    %1182 = vmatprep.subr.bf16.mxu0 0
    %1183 = vmatpush1.bf16.msra.mxu0 0
    %1184 = vmatprep.subr.bf16.mxu0 0
    %1185 = vmatpush1.bf16.msra.mxu0 0
    %1186 = vmatprep.subr.bf16.mxu0 0
    %1187 = vmatpush1.bf16.msra.mxu0 0
    %1188 = vmatprep.subr.bf16.mxu0 0
    %1189 = vmatpush1.bf16.msra.mxu0 0
    %1190 = vmatprep.subr.bf16.mxu0 0
    %1191 = vmatpush1.bf16.msra.mxu0 0
    %1192 = vmatprep.subr.bf16.mxu0 0
    %1193 = vmatpush1.bf16.msra.mxu0 0
    %1194 = vmatprep.subr.bf16.mxu0 0
    %1195 = vmatpush1.bf16.msra.mxu0 0
    %1196 = vmatprep.subr.bf16.mxu0 0
    %1197 = vmatpush1.bf16.msra.mxu0 0
    %1198 = vmatprep.mubr.bf16.mxu0 0
    %1199 = vmatmul.mubr.bf16.gmra.mrb[0].mxu0 %v185
    %v1200 = vpop.f32.mrb[0].mxu0
    %v1201 = vadd.f32 %v1164, %v1200
    %v1202 = vpop.f32.mrb[0].mxu0
    %v1203 = vpop.f32.mrb[0].mxu0
    %v1204 = vadd.f32 %v1164, %v1203
    %v1205 = vpop.f32.mrb[0].mxu0
    %1206 = vmatprep.mubr.bf16.mxu0 0
    %1207 = vmatmul.mubr.bf16.gmra.mrb[0].mxu0 %v188
    %v1208 = vpop.f32.mrb[0].mxu0
    %v1209 = vadd.f32 %v1164, %v1208
    %v1210 = vpop.f32.mrb[0].mxu0
    %v1211 = vpop.f32.mrb[0].mxu0
    %v1212 = vadd.f32 %v1164, %v1211
    %v1213 = vpop.f32.mrb[0].mxu0
    %1214 = vdwg.mxu0
    %v1215 = vpack.c.bf16 %v1016, %v1013
    %v1216 = vpack.c.bf16 %v1106, %v1103
    %v1217 = vpack.c.bf16 %v1114, %v1111
    %v1219 = vsel %vm330, %v1215, 0
    %v1222 = vsel %vm330, %v1216, 0
    %v1225 = vsel %vm330, %v1217, 0
    %1227 = vmatprep.subr.bf16.mxu0 0
    %1228 = vmatpush1.bf16.xpose.msra.mxu0 %v1222
    %1229 = vmatprep.subr.bf16.mxu0 0
    %1230 = vmatpush1.bf16.xpose.msra.mxu0 %v1225
    %1231 = vmatprep.subr.bf16.mxu0 0
    %1232 = vmatpush1.bf16.xpose.msra.mxu0 0
    %1233 = vmatprep.subr.bf16.mxu0 0
    %1234 = vmatpush1.bf16.xpose.msra.mxu0 0
    %1235 = vmatprep.subr.bf16.mxu0 0
    %1236 = vmatpush1.bf16.xpose.msra.mxu0 0
    %1237 = vmatprep.subr.bf16.mxu0 0
    %1238 = vmatpush1.bf16.xpose.msra.mxu0 0
    %1239 = vmatprep.subr.bf16.mxu0 0
    %1240 = vmatpush1.bf16.xpose.msra.mxu0 0
    %1241 = vmatprep.subr.bf16.mxu0 0
    %1242 = vmatpush1.bf16.xpose.msra.mxu0 0
    %1243 = vmatprep.subr.bf16.mxu0 0
    %1244 = vmatpush1.bf16.xpose.msra.mxu0 0
    %1245 = vmatprep.subr.bf16.mxu0 0
    %1246 = vmatpush1.bf16.xpose.msra.mxu0 0
    %1247 = vmatprep.subr.bf16.mxu0 0
    %1248 = vmatpush1.bf16.xpose.msra.mxu0 0
    %1249 = vmatprep.subr.bf16.mxu0 0
    %1250 = vmatpush1.bf16.xpose.msra.mxu0 0
    %1251 = vmatprep.subr.bf16.mxu0 0
    %1252 = vmatpush1.bf16.xpose.msra.mxu0 0
    %1253 = vmatprep.subr.bf16.mxu0 0
    %1254 = vmatpush1.bf16.xpose.msra.mxu0 0
    %1255 = vmatprep.subr.bf16.mxu0 0
    %1256 = vmatpush1.bf16.xpose.msra.mxu0 0
    %1257 = vmatprep.subr.bf16.mxu0 0
    %1258 = vmatpush1.bf16.xpose.msra.mxu0 0
    %1259 = vmatprep.mubr.bf16.mxu0 0
    %1260 = vmatmul.mubr.bf16.gmra.mrb[0].mxu0 %v1219
    %v1261 = vpop.f32.mrb[0].mxu0
    %v1262 = vadd.f32 0.0, %v1261
    %v1263 = vpop.f32.mrb[0].mxu0
    %v1264 = vpop.f32.mrb[0].mxu0
    %v1265 = vadd.f32 0.0, %v1264
    %v1266 = vpop.f32.mrb[0].mxu0
    %1267 = vdwg.mxu0
    %v1268 = vsel %vm330, %v1262, -inf
    %1269 = vmax.xlane.f32.xlu0 %v1268
    %v1270 = vpop.xlane.xlu0 %1269
    %v1271 = vsel %vm330, %v1265, -inf
    %1272 = vmax.xlane.f32.xlu0 %v1271
    %v1273 = vpop.xlane.xlu0 %1272
    %v1274 = vsub.f32 %v1262, %v1270
    %v1275 = vsub.f32 %v1265, %v1273
    %v1276 = vmul.f32 %v1274, 1.442695
    %v1277 = vpow.pop %v1276
    %v1278 = vmul.f32 %v1275, 1.442695
    %v1279 = vpow.pop %v1278
    %v1280 = vsel %vm330, %v1277, 0.0
    %1281 = vadd.xlane.f32.xlu0 %v1280
    %v1282 = vpop.xlane.xlu0 %1281
    %v1283 = vsel %vm330, %v1279, 0.0
    %1284 = vadd.xlane.f32.xlu0 %v1283
    %v1285 = vpop.xlane.xlu0 %1284
    %v1286 = vrcp.pop %v1282
    %v1287 = vrcp.pop %v1285
    %v1288 = vmul.f32 %v1277, %v1286
    %v1289 = vmul.f32 %v1279, %v1287
    %v1290 = vpack.c.bf16 %v1289, %v1288
    %v1291 = vpack.c.bf16 %v1204, %v1201
    %v1292 = vpack.c.bf16 %v1212, %v1209
    %v1294 = vsel %vm330, %v1290, 0
    %1296 = vmatprep.subr.bf16.mxu0 0
    %1297 = vmatpush1.bf16.msra.mxu0 %v1291
    %1298 = vmatprep.subr.bf16.mxu0 0
    %1299 = vmatpush1.bf16.msra.mxu0 %v1292
    %1300 = vmatprep.subr.bf16.mxu0 0
    %1301 = vmatpush1.bf16.msra.mxu0 0
    %1302 = vmatprep.subr.bf16.mxu0 0
    %1303 = vmatpush1.bf16.msra.mxu0 0
    %1304 = vmatprep.subr.bf16.mxu0 0
    %1305 = vmatpush1.bf16.msra.mxu0 0
    %1306 = vmatprep.subr.bf16.mxu0 0
    %1307 = vmatpush1.bf16.msra.mxu0 0
    %1308 = vmatprep.subr.bf16.mxu0 0
    %1309 = vmatpush1.bf16.msra.mxu0 0
    %1310 = vmatprep.subr.bf16.mxu0 0
    %1311 = vmatpush1.bf16.msra.mxu0 0
    %1312 = vmatprep.subr.bf16.mxu0 0
    %1313 = vmatpush1.bf16.msra.mxu0 0
    %1314 = vmatprep.subr.bf16.mxu0 0
    %1315 = vmatpush1.bf16.msra.mxu0 0
    %1316 = vmatprep.subr.bf16.mxu0 0
    %1317 = vmatpush1.bf16.msra.mxu0 0
    %1318 = vmatprep.subr.bf16.mxu0 0
    %1319 = vmatpush1.bf16.msra.mxu0 0
    %1320 = vmatprep.subr.bf16.mxu0 0
    %1321 = vmatpush1.bf16.msra.mxu0 0
    %1322 = vmatprep.subr.bf16.mxu0 0
    %1323 = vmatpush1.bf16.msra.mxu0 0
    %1324 = vmatprep.subr.bf16.mxu0 0
    %1325 = vmatpush1.bf16.msra.mxu0 0
    %1326 = vmatprep.subr.bf16.mxu0 0
    %1327 = vmatpush1.bf16.msra.mxu0 0
    %1328 = vmatprep.mubr.bf16.mxu0 0
    %1329 = vmatmul.mubr.bf16.gmra.mrb[0].mxu0 %v1294
    %v1330 = vpop.f32.mrb[0].mxu0
    %v1331 = vadd.f32 0.0, %v1330
    %v1332 = vpop.f32.mrb[0].mxu0
    %v1333 = vpop.f32.mrb[0].mxu0
    %v1334 = vadd.f32 0.0, %v1333
    %v1335 = vpop.f32.mrb[0].mxu0
    %1336 = vdwg.mxu0
    %v1337 = vpack.c.bf16 %v1334, %v1331
    %1339 = vrot.lane.b32.xlu0 %v1337, 64
    %v1340 = vpop.permute.xlu0 %1339
    %vm1342 = vcmask 785920
    %1343 = vst.msk [vmem:[#allocation2] sm:$0xff] %vm1342, %v1340
    %v1344 = vld [vmem:[%s2] sm:$0xf]
    %v1345 = vld [vmem:[%s2 + $0x4] sm:$0xf]
    %v1346 = vld [vmem:[%s2 + $0x8] sm:$0xf]
    %v1347 = vld [vmem:[%s2 + $0xc] sm:$0xf]
    %v1348 = vld [vmem:[%s2 + $0x10] sm:$0xf]
    %v1349 = vld [vmem:[%s2 + $0x14] sm:$0xf]
    %v1350 = vld [vmem:[%s2 + $0x18] sm:$0xf]
    %v1351 = vld [vmem:[%s2 + $0x1c] sm:$0xf]
    %v1352 = vld [vmem:[%s2 + $0x20] sm:$0xf]
    %v1353 = vld [vmem:[%s2 + $0x24] sm:$0xf]
    %v1354 = vld [vmem:[%s2 + $0x28] sm:$0xf]
    %v1355 = vld [vmem:[%s2 + $0x2c] sm:$0xf]
    %v1356 = vld [vmem:[%s2 + $0x30] sm:$0xf]
    %v1357 = vld [vmem:[%s2 + $0x34] sm:$0xf]
    %v1358 = vld [vmem:[%s2 + $0x38] sm:$0xf]
    %v1359 = vld [vmem:[%s2 + $0x3c] sm:$0xf]
    %v1376 = vunpack.c.l.b16 %v1344
    %v1377 = vunpack.c.l.b16 %v1345
    %v1378 = vunpack.c.l.b16 %v1346
    %v1379 = vunpack.c.l.b16 %v1347
    %v1380 = vunpack.c.l.b16 %v1348
    %v1381 = vunpack.c.l.b16 %v1349
    %v1382 = vunpack.c.l.b16 %v1350
    %v1383 = vunpack.c.l.b16 %v1351
    %v1384 = vunpack.c.l.b16 %v1352
    %v1385 = vunpack.c.l.b16 %v1353
    %v1386 = vunpack.c.l.b16 %v1354
    %v1387 = vunpack.c.l.b16 %v1355
    %v1388 = vunpack.c.l.b16 %v1356
    %v1389 = vunpack.c.l.b16 %v1357
    %v1390 = vunpack.c.l.b16 %v1358
    %v1391 = vunpack.c.l.b16 %v1359
    %v1392 = vpack.c.b16 %v1377, %v1376
    %v1393 = vpack.c.b16 %v1379, %v1378
    %v1394 = vpack.c.b16 %v1381, %v1380
    %v1395 = vpack.c.b16 %v1383, %v1382
    %v1396 = vpack.c.b16 %v1385, %v1384
    %v1397 = vpack.c.b16 %v1387, %v1386
    %v1398 = vpack.c.b16 %v1389, %v1388
    %v1399 = vpack.c.b16 %v1391, %v1390
    %1400 = vrot.lane.b32.xlu0 %v1392, 32
    %v1401 = vpop.permute.xlu0 %1400
    %1402 = vrot.lane.b32.xlu0 %v1393, 32
    %v1403 = vpop.permute.xlu0 %1402
    %1404 = vrot.lane.b32.xlu0 %v1394, 32
    %v1405 = vpop.permute.xlu0 %1404
    %1406 = vrot.lane.b32.xlu0 %v1395, 32
    %v1407 = vpop.permute.xlu0 %1406
    %1408 = vrot.lane.b32.xlu0 %v1396, 32
    %v1409 = vpop.permute.xlu0 %1408
    %1410 = vrot.lane.b32.xlu0 %v1397, 32
    %v1411 = vpop.permute.xlu0 %1410
    %1412 = vrot.lane.b32.xlu0 %v1398, 32
    %v1413 = vpop.permute.xlu0 %1412
    %1414 = vrot.lane.b32.xlu0 %v1399, 32
    %v1415 = vpop.permute.xlu0 %1414
    %1424 = vmatprep.subr.bf16.mxu0 0
    %1425 = vmatpush1.bf16.msra.mxu0 %v1401
    %1426 = vmatprep.subr.bf16.mxu0 0
    %1427 = vmatpush1.bf16.msra.mxu0 %v1403
    %1428 = vmatprep.subr.bf16.mxu0 0
    %1429 = vmatpush1.bf16.msra.mxu0 %v1405
    %1430 = vmatprep.subr.bf16.mxu0 0
    %1431 = vmatpush1.bf16.msra.mxu0 %v1407
    %1432 = vmatprep.subr.bf16.mxu0 0
    %1433 = vmatpush1.bf16.msra.mxu0 %v1409
    %1434 = vmatprep.subr.bf16.mxu0 0
    %1435 = vmatpush1.bf16.msra.mxu0 %v1411
    %1436 = vmatprep.subr.bf16.mxu0 0
    %1437 = vmatpush1.bf16.msra.mxu0 %v1413
    %1438 = vmatprep.subr.bf16.mxu0 0
    %1439 = vmatpush1.bf16.msra.mxu0 %v1415
    %1440 = vmatprep.subr.bf16.mxu0 0
    %1441 = vmatpush1.bf16.msra.mxu0 0
    %1442 = vmatprep.subr.bf16.mxu0 0
    %1443 = vmatpush1.bf16.msra.mxu0 0
    %1444 = vmatprep.subr.bf16.mxu0 0
    %1445 = vmatpush1.bf16.msra.mxu0 0
    %1446 = vmatprep.subr.bf16.mxu0 0
    %1447 = vmatpush1.bf16.msra.mxu0 0
    %1448 = vmatprep.subr.bf16.mxu0 0
    %1449 = vmatpush1.bf16.msra.mxu0 0
    %1450 = vmatprep.subr.bf16.mxu0 0
    %1451 = vmatpush1.bf16.msra.mxu0 0
    %1452 = vmatprep.subr.bf16.mxu0 0
    %1453 = vmatpush1.bf16.msra.mxu0 0
    %1454 = vmatprep.subr.bf16.mxu0 0
    %1455 = vmatpush1.bf16.msra.mxu0 0
    %1456 = vmatprep.mubr.bf16.mxu0 0
    %1457 = vmatmul.mubr.bf16.gmra.mrb[0].mxu0 %v32
    %v1458 = vpop.f32.mrb[0].mxu0
    %v1459 = vadd.f32 0.0, %v1458
    %v1460 = vpop.f32.mrb[0].mxu0
    %v1461 = vpop.f32.mrb[0].mxu0
    %v1462 = vadd.f32 0.0, %v1461
    %v1463 = vpop.f32.mrb[0].mxu0
    %1464 = vdwg.mxu0
    %v1465 = vld [vmem:[%s3] sm:$0xf]
    %v1466 = vld [vmem:[%s3 + $0x8] sm:$0xf]
    %v1467 = vld [vmem:[%s3 + $0x10] sm:$0xf]
    %v1468 = vld [vmem:[%s3 + $0x18] sm:$0xf]
    %v1469 = vld [vmem:[%s3 + $0x20] sm:$0xf]
    %v1470 = vld [vmem:[%s3 + $0x28] sm:$0xf]
    %v1471 = vld [vmem:[%s3 + $0x30] sm:$0xf]
    %v1472 = vld [vmem:[%s3 + $0x38] sm:$0xf]
    %v1473 = vld [vmem:[%s4] sm:$0x1]
    %v1475 = vlaneseq
    %v1476 = vshrl.u32 %v1475, 7
    %v1477 = vsub.s32 0, %v1476
    %v1478 = vrot.slane %v1473, %v1477
    %v1487 = vunpack.c.l.b16 %v1465
    %v1488 = vunpack.c.l.b16 %v1466
    %v1489 = vunpack.c.l.b16 %v1467
    %v1490 = vunpack.c.l.b16 %v1468
    %v1491 = vunpack.c.l.b16 %v1469
    %v1492 = vunpack.c.l.b16 %v1470
    %v1493 = vunpack.c.l.b16 %v1471
    %v1494 = vunpack.c.l.b16 %v1472
    %v1495 = vpack.c.b16 %v1488, %v1487
    %v1496 = vpack.c.b16 %v1490, %v1489
    %v1497 = vpack.c.b16 %v1492, %v1491
    %v1498 = vpack.c.b16 %v1494, %v1493
    %1499 = vrot.lane.b32.xlu0 %v1495, 32
    %v1500 = vpop.permute.xlu0 %1499
    %1501 = vrot.lane.b32.xlu0 %v1496, 32
    %v1502 = vpop.permute.xlu0 %1501
    %1503 = vrot.lane.b32.xlu0 %v1497, 32
    %v1504 = vpop.permute.xlu0 %1503
    %1505 = vrot.lane.b32.xlu0 %v1498, 32
    %v1506 = vpop.permute.xlu0 %1505
    %1511 = vrot.lane.b32.xlu0 %v1478, 32
    %v1512 = vpop.permute.xlu0 %1511
    %1514 = vmatprep.subr.bf16.mxu0 0
    %1515 = vmatpush1.bf16.msra.mxu0 %v1500
    %1516 = vmatprep.subr.bf16.mxu0 0
    %1517 = vmatpush1.bf16.msra.mxu0 %v1502
    %1518 = vmatprep.subr.bf16.mxu0 0
    %1519 = vmatpush1.bf16.msra.mxu0 %v1504
    %1520 = vmatprep.subr.bf16.mxu0 0
    %1521 = vmatpush1.bf16.msra.mxu0 %v1506
    %1522 = vmatprep.subr.bf16.mxu0 0
    %1523 = vmatpush1.bf16.msra.mxu0 0
    %1524 = vmatprep.subr.bf16.mxu0 0
    %1525 = vmatpush1.bf16.msra.mxu0 0
    %1526 = vmatprep.subr.bf16.mxu0 0
    %1527 = vmatpush1.bf16.msra.mxu0 0
    %1528 = vmatprep.subr.bf16.mxu0 0
    %1529 = vmatpush1.bf16.msra.mxu0 0
    %1530 = vmatprep.subr.bf16.mxu0 0
    %1531 = vmatpush1.bf16.msra.mxu0 0
    %1532 = vmatprep.subr.bf16.mxu0 0
    %1533 = vmatpush1.bf16.msra.mxu0 0
    %1534 = vmatprep.subr.bf16.mxu0 0
    %1535 = vmatpush1.bf16.msra.mxu0 0
    %1536 = vmatprep.subr.bf16.mxu0 0
    %1537 = vmatpush1.bf16.msra.mxu0 0
    %1538 = vmatprep.subr.bf16.mxu0 0
    %1539 = vmatpush1.bf16.msra.mxu0 0
    %1540 = vmatprep.subr.bf16.mxu0 0
    %1541 = vmatpush1.bf16.msra.mxu0 0
    %1542 = vmatprep.subr.bf16.mxu0 0
    %1543 = vmatpush1.bf16.msra.mxu0 0
    %1544 = vmatprep.subr.bf16.mxu0 0
    %1545 = vmatpush1.bf16.msra.mxu0 0
    %1546 = vmatprep.mubr.bf16.mxu0 0
    %1547 = vmatmul.mubr.bf16.gmra.mrb[0].mxu0 %v185
    %v1548 = vpop.f32.mrb[0].mxu0
    %v1549 = vadd.f32 %v1512, %v1548
    %v1550 = vpop.f32.mrb[0].mxu0
    %v1551 = vpop.f32.mrb[0].mxu0
    %v1552 = vadd.f32 %v1512, %v1551
    %v1553 = vpop.f32.mrb[0].mxu0
    %1554 = vmatprep.mubr.bf16.mxu0 0
    %1555 = vmatmul.mubr.bf16.gmra.mrb[0].mxu0 %v188
    %v1556 = vpop.f32.mrb[0].mxu0
    %v1557 = vadd.f32 %v1512, %v1556
    %v1558 = vpop.f32.mrb[0].mxu0
    %v1559 = vpop.f32.mrb[0].mxu0
    %v1560 = vadd.f32 %v1512, %v1559
    %v1561 = vpop.f32.mrb[0].mxu0
    %1562 = vdwg.mxu0
    %v1563 = vld [vmem:[%s3 + $0x4] sm:$0xf]
    %v1564 = vld [vmem:[%s3 + $0xc] sm:$0xf]
    %v1565 = vld [vmem:[%s3 + $0x14] sm:$0xf]
    %v1566 = vld [vmem:[%s3 + $0x1c] sm:$0xf]
    %v1567 = vld [vmem:[%s3 + $0x24] sm:$0xf]
    %v1568 = vld [vmem:[%s3 + $0x2c] sm:$0xf]
    %v1569 = vld [vmem:[%s3 + $0x34] sm:$0xf]
    %v1570 = vld [vmem:[%s3 + $0x3c] sm:$0xf]
    %v1571 = vld [vmem:[%s4 + $0x1] sm:$0x1]
    %v1573 = vlaneseq
    %v1574 = vshrl.u32 %v1573, 7
    %v1575 = vsub.s32 0, %v1574
    %v1576 = vrot.slane %v1571, %v1575
    %v1585 = vunpack.c.l.b16 %v1563
    %v1586 = vunpack.c.l.b16 %v1564
    %v1587 = vunpack.c.l.b16 %v1565
    %v1588 = vunpack.c.l.b16 %v1566
    %v1589 = vunpack.c.l.b16 %v1567
    %v1590 = vunpack.c.l.b16 %v1568
    %v1591 = vunpack.c.l.b16 %v1569
    %v1592 = vunpack.c.l.b16 %v1570
    %v1593 = vpack.c.b16 %v1586, %v1585
    %v1594 = vpack.c.b16 %v1588, %v1587
    %v1595 = vpack.c.b16 %v1590, %v1589
    %v1596 = vpack.c.b16 %v1592, %v1591
    %1597 = vrot.lane.b32.xlu0 %v1593, 32
    %v1598 = vpop.permute.xlu0 %1597
    %1599 = vrot.lane.b32.xlu0 %v1594, 32
    %v1600 = vpop.permute.xlu0 %1599
    %1601 = vrot.lane.b32.xlu0 %v1595, 32
    %v1602 = vpop.permute.xlu0 %1601
    %1603 = vrot.lane.b32.xlu0 %v1596, 32
    %v1604 = vpop.permute.xlu0 %1603
    %1609 = vrot.lane.b32.xlu0 %v1576, 32
    %v1610 = vpop.permute.xlu0 %1609
    %1612 = vmatprep.subr.bf16.mxu0 0
    %1613 = vmatpush1.bf16.msra.mxu0 %v1598
    %1614 = vmatprep.subr.bf16.mxu0 0
    %1615 = vmatpush1.bf16.msra.mxu0 %v1600
    %1616 = vmatprep.subr.bf16.mxu0 0
    %1617 = vmatpush1.bf16.msra.mxu0 %v1602
    %1618 = vmatprep.subr.bf16.mxu0 0
    %1619 = vmatpush1.bf16.msra.mxu0 %v1604
    %1620 = vmatprep.subr.bf16.mxu0 0
    %1621 = vmatpush1.bf16.msra.mxu0 0
    %1622 = vmatprep.subr.bf16.mxu0 0
    %1623 = vmatpush1.bf16.msra.mxu0 0
    %1624 = vmatprep.subr.bf16.mxu0 0
    %1625 = vmatpush1.bf16.msra.mxu0 0
    %1626 = vmatprep.subr.bf16.mxu0 0
    %1627 = vmatpush1.bf16.msra.mxu0 0
    %1628 = vmatprep.subr.bf16.mxu0 0
    %1629 = vmatpush1.bf16.msra.mxu0 0
    %1630 = vmatprep.subr.bf16.mxu0 0
    %1631 = vmatpush1.bf16.msra.mxu0 0
    %1632 = vmatprep.subr.bf16.mxu0 0
    %1633 = vmatpush1.bf16.msra.mxu0 0
    %1634 = vmatprep.subr.bf16.mxu0 0
    %1635 = vmatpush1.bf16.msra.mxu0 0
    %1636 = vmatprep.subr.bf16.mxu0 0
    %1637 = vmatpush1.bf16.msra.mxu0 0
    %1638 = vmatprep.subr.bf16.mxu0 0
    %1639 = vmatpush1.bf16.msra.mxu0 0
    %1640 = vmatprep.subr.bf16.mxu0 0
    %1641 = vmatpush1.bf16.msra.mxu0 0
    %1642 = vmatprep.subr.bf16.mxu0 0
    %1643 = vmatpush1.bf16.msra.mxu0 0
    %1644 = vmatprep.mubr.bf16.mxu0 0
    %1645 = vmatmul.mubr.bf16.gmra.mrb[0].mxu0 %v185
    %v1646 = vpop.f32.mrb[0].mxu0
    %v1647 = vadd.f32 %v1610, %v1646
    %v1648 = vpop.f32.mrb[0].mxu0
    %v1649 = vpop.f32.mrb[0].mxu0
    %v1650 = vadd.f32 %v1610, %v1649
    %v1651 = vpop.f32.mrb[0].mxu0
    %1652 = vmatprep.mubr.bf16.mxu0 0
    %1653 = vmatmul.mubr.bf16.gmra.mrb[0].mxu0 %v188
    %v1654 = vpop.f32.mrb[0].mxu0
    %v1655 = vadd.f32 %v1610, %v1654
    %v1656 = vpop.f32.mrb[0].mxu0
    %v1657 = vpop.f32.mrb[0].mxu0
    %v1658 = vadd.f32 %v1610, %v1657
    %v1659 = vpop.f32.mrb[0].mxu0
    %1660 = vdwg.mxu0
    %v1661 = vpack.c.bf16 %v1462, %v1459
    %v1662 = vpack.c.bf16 %v1552, %v1549
    %v1663 = vpack.c.bf16 %v1560, %v1557
    %v1665 = vsel %vm330, %v1661, 0
    %v1668 = vsel %vm330, %v1662, 0
    %v1671 = vsel %vm330, %v1663, 0
    %1673 = vmatprep.subr.bf16.mxu0 0
    %1674 = vmatpush1.bf16.xpose.msra.mxu0 %v1668
    %1675 = vmatprep.subr.bf16.mxu0 0
    %1676 = vmatpush1.bf16.xpose.msra.mxu0 %v1671
    %1677 = vmatprep.subr.bf16.mxu0 0
    %1678 = vmatpush1.bf16.xpose.msra.mxu0 0
    %1679 = vmatprep.subr.bf16.mxu0 0
    %1680 = vmatpush1.bf16.xpose.msra.mxu0 0
    %1681 = vmatprep.subr.bf16.mxu0 0
    %1682 = vmatpush1.bf16.xpose.msra.mxu0 0
    %1683 = vmatprep.subr.bf16.mxu0 0
    %1684 = vmatpush1.bf16.xpose.msra.mxu0 0
    %1685 = vmatprep.subr.bf16.mxu0 0
    %1686 = vmatpush1.bf16.xpose.msra.mxu0 0
    %1687 = vmatprep.subr.bf16.mxu0 0
    %1688 = vmatpush1.bf16.xpose.msra.mxu0 0
    %1689 = vmatprep.subr.bf16.mxu0 0
    %1690 = vmatpush1.bf16.xpose.msra.mxu0 0
    %1691 = vmatprep.subr.bf16.mxu0 0
    %1692 = vmatpush1.bf16.xpose.msra.mxu0 0
    %1693 = vmatprep.subr.bf16.mxu0 0
    %1694 = vmatpush1.bf16.xpose.msra.mxu0 0
    %1695 = vmatprep.subr.bf16.mxu0 0
    %1696 = vmatpush1.bf16.xpose.msra.mxu0 0
    %1697 = vmatprep.subr.bf16.mxu0 0
    %1698 = vmatpush1.bf16.xpose.msra.mxu0 0
    %1699 = vmatprep.subr.bf16.mxu0 0
    %1700 = vmatpush1.bf16.xpose.msra.mxu0 0
    %1701 = vmatprep.subr.bf16.mxu0 0
    %1702 = vmatpush1.bf16.xpose.msra.mxu0 0
    %1703 = vmatprep.subr.bf16.mxu0 0
    %1704 = vmatpush1.bf16.xpose.msra.mxu0 0
    %1705 = vmatprep.mubr.bf16.mxu0 0
    %1706 = vmatmul.mubr.bf16.gmra.mrb[0].mxu0 %v1665
    %v1707 = vpop.f32.mrb[0].mxu0
    %v1708 = vadd.f32 0.0, %v1707
    %v1709 = vpop.f32.mrb[0].mxu0
    %v1710 = vpop.f32.mrb[0].mxu0
    %v1711 = vadd.f32 0.0, %v1710
    %v1712 = vpop.f32.mrb[0].mxu0
    %1713 = vdwg.mxu0
    %v1714 = vsel %vm330, %v1708, -inf
    %1715 = vmax.xlane.f32.xlu0 %v1714
    %v1716 = vpop.xlane.xlu0 %1715
    %v1717 = vsel %vm330, %v1711, -inf
    %1718 = vmax.xlane.f32.xlu0 %v1717
    %v1719 = vpop.xlane.xlu0 %1718
    %v1720 = vsub.f32 %v1708, %v1716
    %v1721 = vsub.f32 %v1711, %v1719
    %v1722 = vmul.f32 %v1720, 1.442695
    %v1723 = vpow.pop %v1722
    %v1724 = vmul.f32 %v1721, 1.442695
    %v1725 = vpow.pop %v1724
    %v1726 = vsel %vm330, %v1723, 0.0
    %1727 = vadd.xlane.f32.xlu0 %v1726
    %v1728 = vpop.xlane.xlu0 %1727
    %v1729 = vsel %vm330, %v1725, 0.0
    %1730 = vadd.xlane.f32.xlu0 %v1729
    %v1731 = vpop.xlane.xlu0 %1730
    %v1732 = vrcp.pop %v1728
    %v1733 = vrcp.pop %v1731
    %v1734 = vmul.f32 %v1723, %v1732
    %v1735 = vmul.f32 %v1725, %v1733
    %v1736 = vpack.c.bf16 %v1735, %v1734
    %v1737 = vpack.c.bf16 %v1650, %v1647
    %v1738 = vpack.c.bf16 %v1658, %v1655
    %v1740 = vsel %vm330, %v1736, 0
    %1742 = vmatprep.subr.bf16.mxu0 0
    %1743 = vmatpush1.bf16.msra.mxu0 %v1737
    %1744 = vmatprep.subr.bf16.mxu0 0
    %1745 = vmatpush1.bf16.msra.mxu0 %v1738
    %1746 = vmatprep.subr.bf16.mxu0 0
    %1747 = vmatpush1.bf16.msra.mxu0 0
    %1748 = vmatprep.subr.bf16.mxu0 0
    %1749 = vmatpush1.bf16.msra.mxu0 0
    %1750 = vmatprep.subr.bf16.mxu0 0
    %1751 = vmatpush1.bf16.msra.mxu0 0
    %1752 = vmatprep.subr.bf16.mxu0 0
    %1753 = vmatpush1.bf16.msra.mxu0 0
    %1754 = vmatprep.subr.bf16.mxu0 0
    %1755 = vmatpush1.bf16.msra.mxu0 0
    %1756 = vmatprep.subr.bf16.mxu0 0
    %1757 = vmatpush1.bf16.msra.mxu0 0
    %1758 = vmatprep.subr.bf16.mxu0 0
    %1759 = vmatpush1.bf16.msra.mxu0 0
    %1760 = vmatprep.subr.bf16.mxu0 0
    %1761 = vmatpush1.bf16.msra.mxu0 0
    %1762 = vmatprep.subr.bf16.mxu0 0
    %1763 = vmatpush1.bf16.msra.mxu0 0
    %1764 = vmatprep.subr.bf16.mxu0 0
    %1765 = vmatpush1.bf16.msra.mxu0 0
    %1766 = vmatprep.subr.bf16.mxu0 0
    %1767 = vmatpush1.bf16.msra.mxu0 0
    %1768 = vmatprep.subr.bf16.mxu0 0
    %1769 = vmatpush1.bf16.msra.mxu0 0
    %1770 = vmatprep.subr.bf16.mxu0 0
    %1771 = vmatpush1.bf16.msra.mxu0 0
    %1772 = vmatprep.subr.bf16.mxu0 0
    %1773 = vmatpush1.bf16.msra.mxu0 0
    %1774 = vmatprep.mubr.bf16.mxu0 0
    %1775 = vmatmul.mubr.bf16.gmra.mrb[0].mxu0 %v1740
    %v1776 = vpop.f32.mrb[0].mxu0
    %v1777 = vadd.f32 0.0, %v1776
    %v1778 = vpop.f32.mrb[0].mxu0
    %v1779 = vpop.f32.mrb[0].mxu0
    %v1780 = vadd.f32 0.0, %v1779
    %v1781 = vpop.f32.mrb[0].mxu0
    %1782 = vdwg.mxu0
    %v1783 = vpack.c.bf16 %v1780, %v1777
    %1785 = vrot.lane.b32.xlu0 %v1783, 96
    %v1786 = vpop.permute.xlu0 %1785
    %vm1788 = vcmask 1048320
    %1789 = vst.msk [vmem:[#allocation2] sm:$0xff] %vm1788, %v1786
    %v1790 = vld [vmem:[#allocation2] sm:$0xff]
    %v1791 = vld [vmem:[%s5] sm:$0xf]
    %v1792 = vld [vmem:[%s5 + $0x4] sm:$0xf]
    %v1793 = vld [vmem:[%s5 + $0x8] sm:$0xf]
    %v1794 = vld [vmem:[%s5 + $0xc] sm:$0xf]
    %v1795 = vld [vmem:[%s5 + $0x10] sm:$0xf]
    %v1796 = vld [vmem:[%s5 + $0x14] sm:$0xf]
    %v1797 = vld [vmem:[%s5 + $0x18] sm:$0xf]
    %v1798 = vld [vmem:[%s5 + $0x1c] sm:$0xf]
    %v1799 = vld [vmem:[%s5 + $0x20] sm:$0xf]
    %v1800 = vld [vmem:[%s5 + $0x24] sm:$0xf]
    %v1801 = vld [vmem:[%s5 + $0x28] sm:$0xf]
    %v1802 = vld [vmem:[%s5 + $0x2c] sm:$0xf]
    %v1803 = vld [vmem:[%s5 + $0x30] sm:$0xf]
    %v1804 = vld [vmem:[%s5 + $0x34] sm:$0xf]
    %v1805 = vld [vmem:[%s5 + $0x38] sm:$0xf]
    %v1806 = vld [vmem:[%s5 + $0x3c] sm:$0xf]
    %v1807 = vld [vmem:[%s6] sm:$0x1]
    %v1809 = vlaneseq
    %v1810 = vshrl.u32 %v1809, 7
    %v1811 = vsub.s32 0, %v1810
    %v1812 = vrot.slane %v1807, %v1811
    %v1830 = vunpack.c.l.b16 %v1791
    %v1831 = vunpack.c.l.b16 %v1792
    %v1832 = vunpack.c.l.b16 %v1793
    %v1833 = vunpack.c.l.b16 %v1794
    %v1834 = vunpack.c.l.b16 %v1795
    %v1835 = vunpack.c.l.b16 %v1796
    %v1836 = vunpack.c.l.b16 %v1797
    %v1837 = vunpack.c.l.b16 %v1798
    %v1838 = vunpack.c.l.b16 %v1799
    %v1839 = vunpack.c.l.b16 %v1800
    %v1840 = vunpack.c.l.b16 %v1801
    %v1841 = vunpack.c.l.b16 %v1802
    %v1842 = vunpack.c.l.b16 %v1803
    %v1843 = vunpack.c.l.b16 %v1804
    %v1844 = vunpack.c.l.b16 %v1805
    %v1845 = vunpack.c.l.b16 %v1806
    %v1846 = vpack.c.b16 %v1831, %v1830
    %v1847 = vpack.c.b16 %v1833, %v1832
    %v1848 = vpack.c.b16 %v1835, %v1834
    %v1849 = vpack.c.b16 %v1837, %v1836
    %v1850 = vpack.c.b16 %v1839, %v1838
    %v1851 = vpack.c.b16 %v1841, %v1840
    %v1852 = vpack.c.b16 %v1843, %v1842
    %v1853 = vpack.c.b16 %v1845, %v1844
    %1862 = vmatprep.subr.bf16.mxu0 0
    %1863 = vmatpush1.bf16.msra.mxu0 %v1846
    %1864 = vmatprep.subr.bf16.mxu0 0
    %1865 = vmatpush1.bf16.msra.mxu0 %v1847
    %1866 = vmatprep.subr.bf16.mxu0 0
    %1867 = vmatpush1.bf16.msra.mxu0 %v1848
    %1868 = vmatprep.subr.bf16.mxu0 0
    %1869 = vmatpush1.bf16.msra.mxu0 %v1849
    %1870 = vmatprep.subr.bf16.mxu0 0
    %1871 = vmatpush1.bf16.msra.mxu0 %v1850
    %1872 = vmatprep.subr.bf16.mxu0 0
    %1873 = vmatpush1.bf16.msra.mxu0 %v1851
    %1874 = vmatprep.subr.bf16.mxu0 0
    %1875 = vmatpush1.bf16.msra.mxu0 %v1852
    %1876 = vmatprep.subr.bf16.mxu0 0
    %1877 = vmatpush1.bf16.msra.mxu0 %v1853
    %1878 = vmatprep.subr.bf16.mxu0 0
    %1879 = vmatpush1.bf16.msra.mxu0 0
    %1880 = vmatprep.subr.bf16.mxu0 0
    %1881 = vmatpush1.bf16.msra.mxu0 0
    %1882 = vmatprep.subr.bf16.mxu0 0
    %1883 = vmatpush1.bf16.msra.mxu0 0
    %1884 = vmatprep.subr.bf16.mxu0 0
    %1885 = vmatpush1.bf16.msra.mxu0 0
    %1886 = vmatprep.subr.bf16.mxu0 0
    %1887 = vmatpush1.bf16.msra.mxu0 0
    %1888 = vmatprep.subr.bf16.mxu0 0
    %1889 = vmatpush1.bf16.msra.mxu0 0
    %1890 = vmatprep.subr.bf16.mxu0 0
    %1891 = vmatpush1.bf16.msra.mxu0 0
    %1892 = vmatprep.subr.bf16.mxu0 0
    %1893 = vmatpush1.bf16.msra.mxu0 0
    %1894 = vmatprep.mubr.bf16.mxu0 0
    %1895 = vmatmul.mubr.bf16.gmra.mrb[0].mxu0 %v1790
    %v1896 = vpop.f32.mrb[0].mxu0
    %v1897 = vadd.f32 %v1812, %v1896
    %v1898 = vpop.f32.mrb[0].mxu0
    %v1899 = vpop.f32.mrb[0].mxu0
    %v1900 = vadd.f32 %v1812, %v1899
    %v1901 = vpop.f32.mrb[0].mxu0
    %1902 = vdwg.mxu0
    %v1903 = vadd.f32 %v1897, %v28
    %v1904 = vadd.f32 %v1900, %v29
    %1905 = vadd.xlane.f32.xlu0 %v1903
    %v1906 = vpop.xlane.xlu0 %1905
    %1907 = vadd.xlane.f32.xlu0 %v1904
    %v1908 = vpop.xlane.xlu0 %1907
    %v1909 = vrcp.pop 128.0
    %v1910 = vmul.f32 %v1906, %v1909
    %v1911 = vmul.f32 %v1908, %v1909
    %v1912 = vmul.f32 %v1903, %v1903
    %v1913 = vmul.f32 %v1904, %v1904
    %1914 = vadd.xlane.f32.xlu0 %v1912
    %v1915 = vpop.xlane.xlu0 %1914
    %1916 = vadd.xlane.f32.xlu0 %v1913
    %v1917 = vpop.xlane.xlu0 %1916
    %v1918 = vmul.f32 %v1915, %v1909
    %v1919 = vmul.f32 %v1917, %v1909
    %v1920 = vmul.f32 %v1910, %v1910
    %v1921 = vmul.f32 %v1911, %v1911
    %v1922 = vsub.f32 %v1918, %v1920
    %v1923 = vsub.f32 %v1919, %v1921
    %v1924 = vsub.f32 %v1903, %v1910
    %v1925 = vsub.f32 %v1904, %v1911
    %v1926 = vadd.f32 %v1922, 1e-05
    %v1927 = vadd.f32 %v1923, 1e-05
    %v1928 = vrsqrt.pop %v1926
    %v1929 = vrsqrt.pop %v1927
    %v1930 = vmul.f32 %v1924, %v1928
    %v1931 = vmul.f32 %v1925, %v1929
    %1932 = vst [vmem:[#allocation3] sm:$0xff] %v1930
    %1933 = vst [vmem:[#allocation3 + $0x8] sm:$0xff] %v1931
    // Predicated region
    $region30: #{cross_layer_forward.1} parent=1 // pred_check
      _
    $region31: #{cross_layer_forward.1} parent=1 // pred_check_branch
      %1935 = sbr.rel (0) target = $region33
    $region32: #{cross_layer_forward.1} parent=1 // pred_region
      %s1937 = ssub.s32 256, 256
      %1938 = vsyncadd [#allocation4], %s1937
      %s1939 = sshll.u32 [#allocation3], 4
      %s1940 = int_to_ptr.vmem [resolvable:$true] %s1939
      %1945 = dma.vmem_to_hbm [thread:$0]  %s1940, 256, %s7, [#allocation4], 128, 128, 8
    $region33: #{cross_layer_forward.1} parent=1 // pred_fallthru
      _
    // Predicated region
    $region34: #{cross_layer_forward.1} parent=1 // pred_check
      _
    $region35: #{cross_layer_forward.1} parent=1 // pred_check_branch
      %1947 = sbr.rel (0) target = $region37
    $region36: #{cross_layer_forward.1} parent=1 // pred_region
      %1948 = dma.done [#allocation4], 256
    $region37: #{cross_layer_forward.1} parent=1 // pred_fallthru
      _
    %1949 = vsyncpa [#allocation4], 1

</llo_original>
